<compile_context>
chip_gen: v6e
topology: v6e:2x2x1
jax: 0.10.0
libtpu: 0.0.40
codegen_flags: <defaults>
</compile_context>

<pallas_src>
import functools

import jax
import jax.numpy as jnp
from jax.experimental import pallas as pl
from jax.experimental.pallas import tpu as pltpu


def _basic_block_kernel(x_ref, w1_ref, g1_ref, b1_ref, w2_ref, g2_ref, b2_ref,
                        o_ref, *, N, H, W, operand_dtype):
    # x_ref:            (C, N*H*W)   activations; batch*spatial on the lane axis
    # w1_ref / w2_ref:  (C, 9*C)     conv weights (operand_dtype), col = tap*Cin + cin
    # g*_ref / b*_ref:  (C, 1)       BN gamma / beta (f32)
    # o_ref:            (C, N*H*W)   f32
    C, L = x_ref.shape
    HW = H * W
    eps = 1e-5
    inv_count = 1.0 / float(N * HW)

    # Per-image row/col of every lane. Power-of-two fast path avoids int32
    # div/mod (prologue-only, keeps VALU slots clear).
    pix = jax.lax.broadcasted_iota(jnp.int32, (1, L), 1)
    if (HW & (HW - 1)) == 0 and (W & (W - 1)) == 0:
        p = pix & (HW - 1)
        row = p >> (W.bit_length() - 1)
        col = p & (W - 1)
    else:
        p = pix % HW
        row = p // W
        col = p % W

    shifts, masks = [], []
    for dy in (-1, 0, 1):
        for dx in (-1, 0, 1):
            shifts.append(dy * W + dx)
            masks.append((row + dy >= 0) & (row + dy < H) &
                         (col + dx >= 0) & (col + dx < W))

    def conv3x3(x, w_ref):
        # In-vreg im2col: each 3x3 tap is a lane roll (XLU) + per-image halo
        # mask. The mask also zeroes taps that would wrap across image
        # boundaries, which makes the roll across the folded N*HW axis correct.
        taps = []
        for t in range(9):
            s = shifts[t]
            shifted = x if s == 0 else pltpu.roll(x, shift=(-s) % L, axis=1)
            taps.append(jnp.where(masks[t], shifted, 0.0))
        im2col = jnp.concatenate(taps, axis=0).astype(operand_dtype)  # (9*C, L)
        # One 2-D MXU matmul per conv: (Cout, 9*Cin) x (9*Cin, N*HW) -> (Cout, N*HW),
        # bf16 operands, f32 accumulation, lane-dense result.
        return jnp.dot(w_ref[...], im2col, preferred_element_type=jnp.float32)

    def bn(y, g_ref, b_ref):
        # Batch statistics (biased variance) in a single f32 pass, then the
        # normalize + affine folded into one per-channel scale/shift FMA.
        s1 = jnp.sum(y, axis=1, keepdims=True)          # (C, 1)
        s2 = jnp.sum(y * y, axis=1, keepdims=True)
        mean = s1 * inv_count
        var = s2 * inv_count - mean * mean
        scale = g_ref[...] * jax.lax.rsqrt(var + eps)
        shift = b_ref[...] - mean * scale
        return y * scale + shift

    x = x_ref[...]                                       # f32 residual
    h = jnp.maximum(bn(conv3x3(x, w1_ref), g1_ref, b1_ref), 0.0)
    h = bn(conv3x3(h, w2_ref), g2_ref, b2_ref)
    # residual add (downsample is None -> Cin == Cout) + final ReLU, all f32
    o_ref[...] = jnp.maximum(h + x, 0.0)


def basic_block(x_nchw, w1, g1, b1, w2, g2, b2, *, operand_dtype=jnp.bfloat16):
    """x_nchw: (N, C, H, W) f32; w*: (9, Cin, Cout) with tap = ky*3+kx;
    g*/b*: (1, C). Returns (N, C, H, W) f32."""
    N, Cin, H, W = x_nchw.shape
    Cout = w1.shape[2]
    assert Cin == Cout, "downsample=None requires inplanes == planes"
    HW = H * W
    L = N * HW

    # Host-side layout plumbing only: fold batch into the lane axis
    # (N, C, H, W) -> (C, N*H*W); weights / BN params are tiny reshapes.
    x2 = jnp.transpose(x_nchw.reshape(N, Cin, HW), (1, 0, 2)).reshape(Cin, L)
    w1m = w1.reshape(9 * Cin, Cout).T.astype(operand_dtype)    # (Cout, 9*Cin)
    w2m = w2.reshape(9 * Cout, Cout).T.astype(operand_dtype)
    g1r, b1r = g1.reshape(Cout, 1), b1.reshape(Cout, 1)
    g2r, b2r = g2.reshape(Cout, 1), b2.reshape(Cout, 1)

    vmem = pl.BlockSpec(memory_space=pltpu.MemorySpace.VMEM)
    kernel = functools.partial(_basic_block_kernel, N=N, H=H, W=W,
                               operand_dtype=operand_dtype)

    out2 = pl.pallas_call(
        kernel,
        out_shape=jax.ShapeDtypeStruct((Cout, L), jnp.float32),
        in_specs=[vmem] * 7,
        out_specs=vmem,
    )(x2, w1m, g1r, b1r, w2m, g2r, b2r)

    return jnp.transpose(out2.reshape(Cout, N, H, W), (1, 0, 2, 3))


def reference(x_nchw, w1, g1, b1, w2, g2, b2):
    """Pure-JAX f32 reference (same semantics as the PyTorch module)."""
    def conv(x, w):
        k = w.reshape(3, 3, w.shape[1], w.shape[2])  # HWIO
        return jax.lax.conv_general_dilated(
            x, k, window_strides=(1, 1), padding=((1, 1), (1, 1)),
            dimension_numbers=('NHWC', 'HWIO', 'NHWC'))

    def bn(x, g, b):
        m = x.mean(axis=(0, 1, 2), keepdims=True)
        v = ((x - m) ** 2).mean(axis=(0, 1, 2), keepdims=True)
        return (x - m) * jax.lax.rsqrt(v + 1e-5) * g + b

    x = jnp.transpose(x_nchw, (0, 2, 3, 1))
    h = jnp.maximum(bn(conv(x, w1), g1, b1), 0.0)
    h = bn(conv(h, w2), g2, b2)
    out = jnp.maximum(h + x, 0.0)
    return jnp.transpose(out, (0, 3, 1, 2))


if __name__ == "__main__":
    N, C, H, W = 2, 4, 16, 16       # inplanes = planes = 4, stride = 1
    key = jax.random.PRNGKey(0)
    k = jax.random.split(key, 7)

    x = jax.random.normal(k[0], (N, C, H, W), jnp.float32)
    w1 = jax.random.normal(k[1], (9, C, C), jnp.float32) * 0.1
    w2 = jax.random.normal(k[2], (9, C, C), jnp.float32) * 0.1
    g1 = 1.0 + 0.1 * jax.random.normal(k[3], (1, C), jnp.float32)
    b1 = 0.1 * jax.random.normal(k[4], (1, C), jnp.float32)
    g2 = 1.0 + 0.1 * jax.random.normal(k[5], (1, C), jnp.float32)
    b2 = 0.1 * jax.random.normal(k[6], (1, C), jnp.float32)

    out = basic_block(x, w1, g1, b1, w2, g2, b2)
    jax.block_until_ready(out)

    ref = reference(x, w1, g1, b1, w2, g2, b2)
    assert out.shape == (N, C, H, W)
    # bf16 MXU operands with f32 accumulation vs. the pure-f32 reference:
    # expected max abs error ~1e-2 after two conv+BN stages.
    err = float(jnp.max(jnp.abs(out - ref)))
    assert err < 5e-2, f"max abs error {err}"

    print("KERNEL_OK")
</pallas_src>

<mosaic_0001>
module attributes {stable_mosaic.version = 11 : i64} {
  func.func @_basic_block_kernel(%arg0: memref<4x512xf32, #tpu.memory_space<vmem>>, %arg1: memref<4x36xbf16, #tpu.memory_space<vmem>>, %arg2: memref<4x1xf32, #tpu.memory_space<vmem>>, %arg3: memref<4x1xf32, #tpu.memory_space<vmem>>, %arg4: memref<4x36xbf16, #tpu.memory_space<vmem>>, %arg5: memref<4x1xf32, #tpu.memory_space<vmem>>, %arg6: memref<4x1xf32, #tpu.memory_space<vmem>>, %arg7: memref<4x512xf32, #tpu.memory_space<vmem>>) attributes {dimension_semantics = [], scalar_prefetch = 0 : i64, scratch_operands = 0 : i64, tpu.core_type = #tpu.core_type<tc>} {
    %0 = tpu.iota {dimensions = array<i32: 1>} : vector<1x512xi32>
    %c255_i32 = arith.constant 255 : i32
    %1 = vector.broadcast %c255_i32 : i32 to vector<1x512xi32>
    %2 = arith.andi %0, %1 : vector<1x512xi32>
    %c4_i32 = arith.constant 4 : i32
    %3 = vector.broadcast %c4_i32 : i32 to vector<1x512xi32>
    %4 = arith.shrsi %2, %3 : vector<1x512xi32>
    %c15_i32 = arith.constant 15 : i32
    %5 = vector.broadcast %c15_i32 : i32 to vector<1x512xi32>
    %6 = arith.andi %2, %5 : vector<1x512xi32>
    %c-1_i32 = arith.constant -1 : i32
    %7 = vector.broadcast %c-1_i32 : i32 to vector<1x512xi32>
    %8 = arith.addi %4, %7 : vector<1x512xi32>
    %c0_i32 = arith.constant 0 : i32
    %9 = vector.broadcast %c0_i32 : i32 to vector<1x512xi32>
    %10 = arith.cmpi sge, %8, %9 : vector<1x512xi32>
    %c-1_i32_0 = arith.constant -1 : i32
    %11 = vector.broadcast %c-1_i32_0 : i32 to vector<1x512xi32>
    %12 = arith.addi %4, %11 : vector<1x512xi32>
    %c16_i32 = arith.constant 16 : i32
    %13 = vector.broadcast %c16_i32 : i32 to vector<1x512xi32>
    %14 = arith.cmpi slt, %12, %13 : vector<1x512xi32>
    %15 = arith.andi %10, %14 : vector<1x512xi1>
    %c-1_i32_1 = arith.constant -1 : i32
    %16 = vector.broadcast %c-1_i32_1 : i32 to vector<1x512xi32>
    %17 = arith.addi %6, %16 : vector<1x512xi32>
    %c0_i32_2 = arith.constant 0 : i32
    %18 = vector.broadcast %c0_i32_2 : i32 to vector<1x512xi32>
    %19 = arith.cmpi sge, %17, %18 : vector<1x512xi32>
    %20 = arith.andi %15, %19 : vector<1x512xi1>
    %c-1_i32_3 = arith.constant -1 : i32
    %21 = vector.broadcast %c-1_i32_3 : i32 to vector<1x512xi32>
    %22 = arith.addi %6, %21 : vector<1x512xi32>
    %c16_i32_4 = arith.constant 16 : i32
    %23 = vector.broadcast %c16_i32_4 : i32 to vector<1x512xi32>
    %24 = arith.cmpi slt, %22, %23 : vector<1x512xi32>
    %25 = arith.andi %20, %24 : vector<1x512xi1>
    %c-1_i32_5 = arith.constant -1 : i32
    %26 = vector.broadcast %c-1_i32_5 : i32 to vector<1x512xi32>
    %27 = arith.addi %4, %26 : vector<1x512xi32>
    %c0_i32_6 = arith.constant 0 : i32
    %28 = vector.broadcast %c0_i32_6 : i32 to vector<1x512xi32>
    %29 = arith.cmpi sge, %27, %28 : vector<1x512xi32>
    %c-1_i32_7 = arith.constant -1 : i32
    %30 = vector.broadcast %c-1_i32_7 : i32 to vector<1x512xi32>
    %31 = arith.addi %4, %30 : vector<1x512xi32>
    %c16_i32_8 = arith.constant 16 : i32
    %32 = vector.broadcast %c16_i32_8 : i32 to vector<1x512xi32>
    %33 = arith.cmpi slt, %31, %32 : vector<1x512xi32>
    %34 = arith.andi %29, %33 : vector<1x512xi1>
    %c0_i32_9 = arith.constant 0 : i32
    %35 = vector.broadcast %c0_i32_9 : i32 to vector<1x512xi32>
    %36 = arith.addi %6, %35 : vector<1x512xi32>
    %c0_i32_10 = arith.constant 0 : i32
    %37 = vector.broadcast %c0_i32_10 : i32 to vector<1x512xi32>
    %38 = arith.cmpi sge, %36, %37 : vector<1x512xi32>
    %39 = arith.andi %34, %38 : vector<1x512xi1>
    %c0_i32_11 = arith.constant 0 : i32
    %40 = vector.broadcast %c0_i32_11 : i32 to vector<1x512xi32>
    %41 = arith.addi %6, %40 : vector<1x512xi32>
    %c16_i32_12 = arith.constant 16 : i32
    %42 = vector.broadcast %c16_i32_12 : i32 to vector<1x512xi32>
    %43 = arith.cmpi slt, %41, %42 : vector<1x512xi32>
    %44 = arith.andi %39, %43 : vector<1x512xi1>
    %c-1_i32_13 = arith.constant -1 : i32
    %45 = vector.broadcast %c-1_i32_13 : i32 to vector<1x512xi32>
    %46 = arith.addi %4, %45 : vector<1x512xi32>
    %c0_i32_14 = arith.constant 0 : i32
    %47 = vector.broadcast %c0_i32_14 : i32 to vector<1x512xi32>
    %48 = arith.cmpi sge, %46, %47 : vector<1x512xi32>
    %c-1_i32_15 = arith.constant -1 : i32
    %49 = vector.broadcast %c-1_i32_15 : i32 to vector<1x512xi32>
    %50 = arith.addi %4, %49 : vector<1x512xi32>
    %c16_i32_16 = arith.constant 16 : i32
    %51 = vector.broadcast %c16_i32_16 : i32 to vector<1x512xi32>
    %52 = arith.cmpi slt, %50, %51 : vector<1x512xi32>
    %53 = arith.andi %48, %52 : vector<1x512xi1>
    %c1_i32 = arith.constant 1 : i32
    %54 = vector.broadcast %c1_i32 : i32 to vector<1x512xi32>
    %55 = arith.addi %6, %54 : vector<1x512xi32>
    %c0_i32_17 = arith.constant 0 : i32
    %56 = vector.broadcast %c0_i32_17 : i32 to vector<1x512xi32>
    %57 = arith.cmpi sge, %55, %56 : vector<1x512xi32>
    %58 = arith.andi %53, %57 : vector<1x512xi1>
    %c1_i32_18 = arith.constant 1 : i32
    %59 = vector.broadcast %c1_i32_18 : i32 to vector<1x512xi32>
    %60 = arith.addi %6, %59 : vector<1x512xi32>
    %c16_i32_19 = arith.constant 16 : i32
    %61 = vector.broadcast %c16_i32_19 : i32 to vector<1x512xi32>
    %62 = arith.cmpi slt, %60, %61 : vector<1x512xi32>
    %63 = arith.andi %58, %62 : vector<1x512xi1>
    %c0_i32_20 = arith.constant 0 : i32
    %64 = vector.broadcast %c0_i32_20 : i32 to vector<1x512xi32>
    %65 = arith.addi %4, %64 : vector<1x512xi32>
    %c0_i32_21 = arith.constant 0 : i32
    %66 = vector.broadcast %c0_i32_21 : i32 to vector<1x512xi32>
    %67 = arith.cmpi sge, %65, %66 : vector<1x512xi32>
    %c0_i32_22 = arith.constant 0 : i32
    %68 = vector.broadcast %c0_i32_22 : i32 to vector<1x512xi32>
    %69 = arith.addi %4, %68 : vector<1x512xi32>
    %c16_i32_23 = arith.constant 16 : i32
    %70 = vector.broadcast %c16_i32_23 : i32 to vector<1x512xi32>
    %71 = arith.cmpi slt, %69, %70 : vector<1x512xi32>
    %72 = arith.andi %67, %71 : vector<1x512xi1>
    %c-1_i32_24 = arith.constant -1 : i32
    %73 = vector.broadcast %c-1_i32_24 : i32 to vector<1x512xi32>
    %74 = arith.addi %6, %73 : vector<1x512xi32>
    %c0_i32_25 = arith.constant 0 : i32
    %75 = vector.broadcast %c0_i32_25 : i32 to vector<1x512xi32>
    %76 = arith.cmpi sge, %74, %75 : vector<1x512xi32>
    %77 = arith.andi %72, %76 : vector<1x512xi1>
    %c-1_i32_26 = arith.constant -1 : i32
    %78 = vector.broadcast %c-1_i32_26 : i32 to vector<1x512xi32>
    %79 = arith.addi %6, %78 : vector<1x512xi32>
    %c16_i32_27 = arith.constant 16 : i32
    %80 = vector.broadcast %c16_i32_27 : i32 to vector<1x512xi32>
    %81 = arith.cmpi slt, %79, %80 : vector<1x512xi32>
    %82 = arith.andi %77, %81 : vector<1x512xi1>
    %c0_i32_28 = arith.constant 0 : i32
    %83 = vector.broadcast %c0_i32_28 : i32 to vector<1x512xi32>
    %84 = arith.addi %4, %83 : vector<1x512xi32>
    %c0_i32_29 = arith.constant 0 : i32
    %85 = vector.broadcast %c0_i32_29 : i32 to vector<1x512xi32>
    %86 = arith.cmpi sge, %84, %85 : vector<1x512xi32>
    %c0_i32_30 = arith.constant 0 : i32
    %87 = vector.broadcast %c0_i32_30 : i32 to vector<1x512xi32>
    %88 = arith.addi %4, %87 : vector<1x512xi32>
    %c16_i32_31 = arith.constant 16 : i32
    %89 = vector.broadcast %c16_i32_31 : i32 to vector<1x512xi32>
    %90 = arith.cmpi slt, %88, %89 : vector<1x512xi32>
    %91 = arith.andi %86, %90 : vector<1x512xi1>
    %c0_i32_32 = arith.constant 0 : i32
    %92 = vector.broadcast %c0_i32_32 : i32 to vector<1x512xi32>
    %93 = arith.addi %6, %92 : vector<1x512xi32>
    %c0_i32_33 = arith.constant 0 : i32
    %94 = vector.broadcast %c0_i32_33 : i32 to vector<1x512xi32>
    %95 = arith.cmpi sge, %93, %94 : vector<1x512xi32>
    %96 = arith.andi %91, %95 : vector<1x512xi1>
    %c0_i32_34 = arith.constant 0 : i32
    %97 = vector.broadcast %c0_i32_34 : i32 to vector<1x512xi32>
    %98 = arith.addi %6, %97 : vector<1x512xi32>
    %c16_i32_35 = arith.constant 16 : i32
    %99 = vector.broadcast %c16_i32_35 : i32 to vector<1x512xi32>
    %100 = arith.cmpi slt, %98, %99 : vector<1x512xi32>
    %101 = arith.andi %96, %100 : vector<1x512xi1>
    %c0_i32_36 = arith.constant 0 : i32
    %102 = vector.broadcast %c0_i32_36 : i32 to vector<1x512xi32>
    %103 = arith.addi %4, %102 : vector<1x512xi32>
    %c0_i32_37 = arith.constant 0 : i32
    %104 = vector.broadcast %c0_i32_37 : i32 to vector<1x512xi32>
    %105 = arith.cmpi sge, %103, %104 : vector<1x512xi32>
    %c0_i32_38 = arith.constant 0 : i32
    %106 = vector.broadcast %c0_i32_38 : i32 to vector<1x512xi32>
    %107 = arith.addi %4, %106 : vector<1x512xi32>
    %c16_i32_39 = arith.constant 16 : i32
    %108 = vector.broadcast %c16_i32_39 : i32 to vector<1x512xi32>
    %109 = arith.cmpi slt, %107, %108 : vector<1x512xi32>
    %110 = arith.andi %105, %109 : vector<1x512xi1>
    %c1_i32_40 = arith.constant 1 : i32
    %111 = vector.broadcast %c1_i32_40 : i32 to vector<1x512xi32>
    %112 = arith.addi %6, %111 : vector<1x512xi32>
    %c0_i32_41 = arith.constant 0 : i32
    %113 = vector.broadcast %c0_i32_41 : i32 to vector<1x512xi32>
    %114 = arith.cmpi sge, %112, %113 : vector<1x512xi32>
    %115 = arith.andi %110, %114 : vector<1x512xi1>
    %c1_i32_42 = arith.constant 1 : i32
    %116 = vector.broadcast %c1_i32_42 : i32 to vector<1x512xi32>
    %117 = arith.addi %6, %116 : vector<1x512xi32>
    %c16_i32_43 = arith.constant 16 : i32
    %118 = vector.broadcast %c16_i32_43 : i32 to vector<1x512xi32>
    %119 = arith.cmpi slt, %117, %118 : vector<1x512xi32>
    %120 = arith.andi %115, %119 : vector<1x512xi1>
    %c1_i32_44 = arith.constant 1 : i32
    %121 = vector.broadcast %c1_i32_44 : i32 to vector<1x512xi32>
    %122 = arith.addi %4, %121 : vector<1x512xi32>
    %c0_i32_45 = arith.constant 0 : i32
    %123 = vector.broadcast %c0_i32_45 : i32 to vector<1x512xi32>
    %124 = arith.cmpi sge, %122, %123 : vector<1x512xi32>
    %c1_i32_46 = arith.constant 1 : i32
    %125 = vector.broadcast %c1_i32_46 : i32 to vector<1x512xi32>
    %126 = arith.addi %4, %125 : vector<1x512xi32>
    %c16_i32_47 = arith.constant 16 : i32
    %127 = vector.broadcast %c16_i32_47 : i32 to vector<1x512xi32>
    %128 = arith.cmpi slt, %126, %127 : vector<1x512xi32>
    %129 = arith.andi %124, %128 : vector<1x512xi1>
    %c-1_i32_48 = arith.constant -1 : i32
    %130 = vector.broadcast %c-1_i32_48 : i32 to vector<1x512xi32>
    %131 = arith.addi %6, %130 : vector<1x512xi32>
    %c0_i32_49 = arith.constant 0 : i32
    %132 = vector.broadcast %c0_i32_49 : i32 to vector<1x512xi32>
    %133 = arith.cmpi sge, %131, %132 : vector<1x512xi32>
    %134 = arith.andi %129, %133 : vector<1x512xi1>
    %c-1_i32_50 = arith.constant -1 : i32
    %135 = vector.broadcast %c-1_i32_50 : i32 to vector<1x512xi32>
    %136 = arith.addi %6, %135 : vector<1x512xi32>
    %c16_i32_51 = arith.constant 16 : i32
    %137 = vector.broadcast %c16_i32_51 : i32 to vector<1x512xi32>
    %138 = arith.cmpi slt, %136, %137 : vector<1x512xi32>
    %139 = arith.andi %134, %138 : vector<1x512xi1>
    %c1_i32_52 = arith.constant 1 : i32
    %140 = vector.broadcast %c1_i32_52 : i32 to vector<1x512xi32>
    %141 = arith.addi %4, %140 : vector<1x512xi32>
    %c0_i32_53 = arith.constant 0 : i32
    %142 = vector.broadcast %c0_i32_53 : i32 to vector<1x512xi32>
    %143 = arith.cmpi sge, %141, %142 : vector<1x512xi32>
    %c1_i32_54 = arith.constant 1 : i32
    %144 = vector.broadcast %c1_i32_54 : i32 to vector<1x512xi32>
    %145 = arith.addi %4, %144 : vector<1x512xi32>
    %c16_i32_55 = arith.constant 16 : i32
    %146 = vector.broadcast %c16_i32_55 : i32 to vector<1x512xi32>
    %147 = arith.cmpi slt, %145, %146 : vector<1x512xi32>
    %148 = arith.andi %143, %147 : vector<1x512xi1>
    %c0_i32_56 = arith.constant 0 : i32
    %149 = vector.broadcast %c0_i32_56 : i32 to vector<1x512xi32>
    %150 = arith.addi %6, %149 : vector<1x512xi32>
    %c0_i32_57 = arith.constant 0 : i32
    %151 = vector.broadcast %c0_i32_57 : i32 to vector<1x512xi32>
    %152 = arith.cmpi sge, %150, %151 : vector<1x512xi32>
    %153 = arith.andi %148, %152 : vector<1x512xi1>
    %c0_i32_58 = arith.constant 0 : i32
    %154 = vector.broadcast %c0_i32_58 : i32 to vector<1x512xi32>
    %155 = arith.addi %6, %154 : vector<1x512xi32>
    %c16_i32_59 = arith.constant 16 : i32
    %156 = vector.broadcast %c16_i32_59 : i32 to vector<1x512xi32>
    %157 = arith.cmpi slt, %155, %156 : vector<1x512xi32>
    %158 = arith.andi %153, %157 : vector<1x512xi1>
    %c1_i32_60 = arith.constant 1 : i32
    %159 = vector.broadcast %c1_i32_60 : i32 to vector<1x512xi32>
    %160 = arith.addi %4, %159 : vector<1x512xi32>
    %c0_i32_61 = arith.constant 0 : i32
    %161 = vector.broadcast %c0_i32_61 : i32 to vector<1x512xi32>
    %162 = arith.cmpi sge, %160, %161 : vector<1x512xi32>
    %c1_i32_62 = arith.constant 1 : i32
    %163 = vector.broadcast %c1_i32_62 : i32 to vector<1x512xi32>
    %164 = arith.addi %4, %163 : vector<1x512xi32>
    %c16_i32_63 = arith.constant 16 : i32
    %165 = vector.broadcast %c16_i32_63 : i32 to vector<1x512xi32>
    %166 = arith.cmpi slt, %164, %165 : vector<1x512xi32>
    %167 = arith.andi %162, %166 : vector<1x512xi1>
    %c1_i32_64 = arith.constant 1 : i32
    %168 = vector.broadcast %c1_i32_64 : i32 to vector<1x512xi32>
    %169 = arith.addi %6, %168 : vector<1x512xi32>
    %c0_i32_65 = arith.constant 0 : i32
    %170 = vector.broadcast %c0_i32_65 : i32 to vector<1x512xi32>
    %171 = arith.cmpi sge, %169, %170 : vector<1x512xi32>
    %172 = arith.andi %167, %171 : vector<1x512xi1>
    %c1_i32_66 = arith.constant 1 : i32
    %173 = vector.broadcast %c1_i32_66 : i32 to vector<1x512xi32>
    %174 = arith.addi %6, %173 : vector<1x512xi32>
    %c16_i32_67 = arith.constant 16 : i32
    %175 = vector.broadcast %c16_i32_67 : i32 to vector<1x512xi32>
    %176 = arith.cmpi slt, %174, %175 : vector<1x512xi32>
    %177 = arith.andi %172, %176 : vector<1x512xi1>
    %c0 = arith.constant 0 : index
    %c0_68 = arith.constant 0 : index
    %178 = vector.load %arg0[%c0, %c0_68] : memref<4x512xf32, #tpu.memory_space<vmem>>, vector<4x512xf32>
    %c17_i32 = arith.constant 17 : i32
    %179 = tpu.dynamic_rotate %178 by %c17_i32 dim 1 : vector<4x512xf32>, i32 -> vector<4x512xf32>
    %cst = arith.constant 0.000000e+00 : f32
    %180 = vector.shape_cast %25 : vector<1x512xi1> to vector<1x512xi1>
    %181 = vector.broadcast %180 : vector<1x512xi1> to vector<4x512xi1>
    %182 = vector.broadcast %cst : f32 to vector<4x512xf32>
    %183 = arith.select %181, %179, %182 : vector<4x512xi1>, vector<4x512xf32>
    %c16_i32_69 = arith.constant 16 : i32
    %184 = tpu.dynamic_rotate %178 by %c16_i32_69 dim 1 : vector<4x512xf32>, i32 -> vector<4x512xf32>
    %cst_70 = arith.constant 0.000000e+00 : f32
    %185 = vector.shape_cast %44 : vector<1x512xi1> to vector<1x512xi1>
    %186 = vector.broadcast %185 : vector<1x512xi1> to vector<4x512xi1>
    %187 = vector.broadcast %cst_70 : f32 to vector<4x512xf32>
    %188 = arith.select %186, %184, %187 : vector<4x512xi1>, vector<4x512xf32>
    %c15_i32_71 = arith.constant 15 : i32
    %189 = tpu.dynamic_rotate %178 by %c15_i32_71 dim 1 : vector<4x512xf32>, i32 -> vector<4x512xf32>
    %cst_72 = arith.constant 0.000000e+00 : f32
    %190 = vector.shape_cast %63 : vector<1x512xi1> to vector<1x512xi1>
    %191 = vector.broadcast %190 : vector<1x512xi1> to vector<4x512xi1>
    %192 = vector.broadcast %cst_72 : f32 to vector<4x512xf32>
    %193 = arith.select %191, %189, %192 : vector<4x512xi1>, vector<4x512xf32>
    %c1_i32_73 = arith.constant 1 : i32
    %194 = tpu.dynamic_rotate %178 by %c1_i32_73 dim 1 : vector<4x512xf32>, i32 -> vector<4x512xf32>
    %cst_74 = arith.constant 0.000000e+00 : f32
    %195 = vector.shape_cast %82 : vector<1x512xi1> to vector<1x512xi1>
    %196 = vector.broadcast %195 : vector<1x512xi1> to vector<4x512xi1>
    %197 = vector.broadcast %cst_74 : f32 to vector<4x512xf32>
    %198 = arith.select %196, %194, %197 : vector<4x512xi1>, vector<4x512xf32>
    %cst_75 = arith.constant 0.000000e+00 : f32
    %199 = vector.shape_cast %101 : vector<1x512xi1> to vector<1x512xi1>
    %200 = vector.broadcast %199 : vector<1x512xi1> to vector<4x512xi1>
    %201 = vector.broadcast %cst_75 : f32 to vector<4x512xf32>
    %202 = arith.select %200, %178, %201 : vector<4x512xi1>, vector<4x512xf32>
    %c511_i32 = arith.constant 511 : i32
    %203 = tpu.dynamic_rotate %178 by %c511_i32 dim 1 : vector<4x512xf32>, i32 -> vector<4x512xf32>
    %cst_76 = arith.constant 0.000000e+00 : f32
    %204 = vector.shape_cast %120 : vector<1x512xi1> to vector<1x512xi1>
    %205 = vector.broadcast %204 : vector<1x512xi1> to vector<4x512xi1>
    %206 = vector.broadcast %cst_76 : f32 to vector<4x512xf32>
    %207 = arith.select %205, %203, %206 : vector<4x512xi1>, vector<4x512xf32>
    %c497_i32 = arith.constant 497 : i32
    %208 = tpu.dynamic_rotate %178 by %c497_i32 dim 1 : vector<4x512xf32>, i32 -> vector<4x512xf32>
    %cst_77 = arith.constant 0.000000e+00 : f32
    %209 = vector.shape_cast %139 : vector<1x512xi1> to vector<1x512xi1>
    %210 = vector.broadcast %209 : vector<1x512xi1> to vector<4x512xi1>
    %211 = vector.broadcast %cst_77 : f32 to vector<4x512xf32>
    %212 = arith.select %210, %208, %211 : vector<4x512xi1>, vector<4x512xf32>
    %c496_i32 = arith.constant 496 : i32
    %213 = tpu.dynamic_rotate %178 by %c496_i32 dim 1 : vector<4x512xf32>, i32 -> vector<4x512xf32>
    %cst_78 = arith.constant 0.000000e+00 : f32
    %214 = vector.shape_cast %158 : vector<1x512xi1> to vector<1x512xi1>
    %215 = vector.broadcast %214 : vector<1x512xi1> to vector<4x512xi1>
    %216 = vector.broadcast %cst_78 : f32 to vector<4x512xf32>
    %217 = arith.select %215, %213, %216 : vector<4x512xi1>, vector<4x512xf32>
    %c495_i32 = arith.constant 495 : i32
    %218 = tpu.dynamic_rotate %178 by %c495_i32 dim 1 : vector<4x512xf32>, i32 -> vector<4x512xf32>
    %cst_79 = arith.constant 0.000000e+00 : f32
    %219 = vector.shape_cast %177 : vector<1x512xi1> to vector<1x512xi1>
    %220 = vector.broadcast %219 : vector<1x512xi1> to vector<4x512xi1>
    %221 = vector.broadcast %cst_79 : f32 to vector<4x512xf32>
    %222 = arith.select %220, %218, %221 : vector<4x512xi1>, vector<4x512xf32>
    %223 = tpu.concatenate %183, %188, %193, %198, %202, %207, %212, %217, %222 in 0 : vector<4x512xf32>, vector<4x512xf32>, vector<4x512xf32>, vector<4x512xf32>, vector<4x512xf32>, vector<4x512xf32>, vector<4x512xf32>, vector<4x512xf32>, vector<4x512xf32> -> vector<36x512xf32>
    %224 = arith.truncf %223 : vector<36x512xf32> to vector<36x512xbf16>
    %c0_80 = arith.constant 0 : index
    %c0_81 = arith.constant 0 : index
    %225 = vector.load %arg1[%c0_80, %c0_81] : memref<4x36xbf16, #tpu.memory_space<vmem>>, vector<4x36xbf16>
    %cst_82 = arith.constant dense<0.000000e+00> : vector<4x512xf32>
    %226 = tpu.matmul %225, %224, %cst_82 {dimension_numbers = #tpu.dot_dimension_numbers<[1], [0], [0], [1], [0, 0, 1, 1], [], []>} : vector<4x36xbf16>, vector<36x512xbf16>, vector<4x512xf32> -> vector<4x512xf32>
    %cst_83 = arith.constant dense<0.000000e+00> : vector<4xf32>
    %227 = vector.multi_reduction <add>, %226, %cst_83 [1] : vector<4x512xf32> to vector<4xf32>
    %228 = vector.shape_cast %227 : vector<4xf32> to vector<4x1xf32>
    %229 = arith.mulf %226, %226 : vector<4x512xf32>
    %cst_84 = arith.constant dense<0.000000e+00> : vector<4xf32>
    %230 = vector.multi_reduction <add>, %229, %cst_84 [1] : vector<4x512xf32> to vector<4xf32>
    %231 = vector.shape_cast %230 : vector<4xf32> to vector<4x1xf32>
    %cst_85 = arith.constant 0.001953125 : f32
    %232 = vector.broadcast %cst_85 : f32 to vector<4x1xf32>
    %233 = arith.mulf %228, %232 : vector<4x1xf32>
    %cst_86 = arith.constant 0.001953125 : f32
    %234 = vector.broadcast %cst_86 : f32 to vector<4x1xf32>
    %235 = arith.mulf %231, %234 : vector<4x1xf32>
    %236 = arith.mulf %233, %233 : vector<4x1xf32>
    %237 = arith.subf %235, %236 : vector<4x1xf32>
    %c0_87 = arith.constant 0 : index
    %c0_88 = arith.constant 0 : index
    %238 = vector.load %arg2[%c0_87, %c0_88] : memref<4x1xf32, #tpu.memory_space<vmem>>, vector<4x1xf32>
    %cst_89 = arith.constant 9.99999974E-6 : f32
    %239 = vector.broadcast %cst_89 : f32 to vector<4x1xf32>
    %240 = arith.addf %237, %239 : vector<4x1xf32>
    %241 = math.rsqrt %240 : vector<4x1xf32>
    %242 = arith.mulf %238, %241 : vector<4x1xf32>
    %c0_90 = arith.constant 0 : index
    %c0_91 = arith.constant 0 : index
    %243 = vector.load %arg3[%c0_90, %c0_91] : memref<4x1xf32, #tpu.memory_space<vmem>>, vector<4x1xf32>
    %244 = arith.mulf %233, %242 : vector<4x1xf32>
    %245 = arith.subf %243, %244 : vector<4x1xf32>
    %246 = vector.broadcast %242 : vector<4x1xf32> to vector<4x512xf32>
    %247 = arith.mulf %226, %246 : vector<4x512xf32>
    %248 = vector.broadcast %245 : vector<4x1xf32> to vector<4x512xf32>
    %249 = arith.addf %247, %248 : vector<4x512xf32>
    %cst_92 = arith.constant 0.000000e+00 : f32
    %250 = vector.broadcast %cst_92 : f32 to vector<4x512xf32>
    %251 = arith.maximumf %249, %250 : vector<4x512xf32>
    %c17_i32_93 = arith.constant 17 : i32
    %252 = tpu.dynamic_rotate %251 by %c17_i32_93 dim 1 : vector<4x512xf32>, i32 -> vector<4x512xf32>
    %cst_94 = arith.constant 0.000000e+00 : f32
    %253 = vector.shape_cast %25 : vector<1x512xi1> to vector<1x512xi1>
    %254 = vector.broadcast %253 : vector<1x512xi1> to vector<4x512xi1>
    %255 = vector.broadcast %cst_94 : f32 to vector<4x512xf32>
    %256 = arith.select %254, %252, %255 : vector<4x512xi1>, vector<4x512xf32>
    %c16_i32_95 = arith.constant 16 : i32
    %257 = tpu.dynamic_rotate %251 by %c16_i32_95 dim 1 : vector<4x512xf32>, i32 -> vector<4x512xf32>
    %cst_96 = arith.constant 0.000000e+00 : f32
    %258 = vector.shape_cast %44 : vector<1x512xi1> to vector<1x512xi1>
    %259 = vector.broadcast %258 : vector<1x512xi1> to vector<4x512xi1>
    %260 = vector.broadcast %cst_96 : f32 to vector<4x512xf32>
    %261 = arith.select %259, %257, %260 : vector<4x512xi1>, vector<4x512xf32>
    %c15_i32_97 = arith.constant 15 : i32
    %262 = tpu.dynamic_rotate %251 by %c15_i32_97 dim 1 : vector<4x512xf32>, i32 -> vector<4x512xf32>
    %cst_98 = arith.constant 0.000000e+00 : f32
    %263 = vector.shape_cast %63 : vector<1x512xi1> to vector<1x512xi1>
    %264 = vector.broadcast %263 : vector<1x512xi1> to vector<4x512xi1>
    %265 = vector.broadcast %cst_98 : f32 to vector<4x512xf32>
    %266 = arith.select %264, %262, %265 : vector<4x512xi1>, vector<4x512xf32>
    %c1_i32_99 = arith.constant 1 : i32
    %267 = tpu.dynamic_rotate %251 by %c1_i32_99 dim 1 : vector<4x512xf32>, i32 -> vector<4x512xf32>
    %cst_100 = arith.constant 0.000000e+00 : f32
    %268 = vector.shape_cast %82 : vector<1x512xi1> to vector<1x512xi1>
    %269 = vector.broadcast %268 : vector<1x512xi1> to vector<4x512xi1>
    %270 = vector.broadcast %cst_100 : f32 to vector<4x512xf32>
    %271 = arith.select %269, %267, %270 : vector<4x512xi1>, vector<4x512xf32>
    %cst_101 = arith.constant 0.000000e+00 : f32
    %272 = vector.shape_cast %101 : vector<1x512xi1> to vector<1x512xi1>
    %273 = vector.broadcast %272 : vector<1x512xi1> to vector<4x512xi1>
    %274 = vector.broadcast %cst_101 : f32 to vector<4x512xf32>
    %275 = arith.select %273, %251, %274 : vector<4x512xi1>, vector<4x512xf32>
    %c511_i32_102 = arith.constant 511 : i32
    %276 = tpu.dynamic_rotate %251 by %c511_i32_102 dim 1 : vector<4x512xf32>, i32 -> vector<4x512xf32>
    %cst_103 = arith.constant 0.000000e+00 : f32
    %277 = vector.shape_cast %120 : vector<1x512xi1> to vector<1x512xi1>
    %278 = vector.broadcast %277 : vector<1x512xi1> to vector<4x512xi1>
    %279 = vector.broadcast %cst_103 : f32 to vector<4x512xf32>
    %280 = arith.select %278, %276, %279 : vector<4x512xi1>, vector<4x512xf32>
    %c497_i32_104 = arith.constant 497 : i32
    %281 = tpu.dynamic_rotate %251 by %c497_i32_104 dim 1 : vector<4x512xf32>, i32 -> vector<4x512xf32>
    %cst_105 = arith.constant 0.000000e+00 : f32
    %282 = vector.shape_cast %139 : vector<1x512xi1> to vector<1x512xi1>
    %283 = vector.broadcast %282 : vector<1x512xi1> to vector<4x512xi1>
    %284 = vector.broadcast %cst_105 : f32 to vector<4x512xf32>
    %285 = arith.select %283, %281, %284 : vector<4x512xi1>, vector<4x512xf32>
    %c496_i32_106 = arith.constant 496 : i32
    %286 = tpu.dynamic_rotate %251 by %c496_i32_106 dim 1 : vector<4x512xf32>, i32 -> vector<4x512xf32>
    %cst_107 = arith.constant 0.000000e+00 : f32
    %287 = vector.shape_cast %158 : vector<1x512xi1> to vector<1x512xi1>
    %288 = vector.broadcast %287 : vector<1x512xi1> to vector<4x512xi1>
    %289 = vector.broadcast %cst_107 : f32 to vector<4x512xf32>
    %290 = arith.select %288, %286, %289 : vector<4x512xi1>, vector<4x512xf32>
    %c495_i32_108 = arith.constant 495 : i32
    %291 = tpu.dynamic_rotate %251 by %c495_i32_108 dim 1 : vector<4x512xf32>, i32 -> vector<4x512xf32>
    %cst_109 = arith.constant 0.000000e+00 : f32
    %292 = vector.shape_cast %177 : vector<1x512xi1> to vector<1x512xi1>
    %293 = vector.broadcast %292 : vector<1x512xi1> to vector<4x512xi1>
    %294 = vector.broadcast %cst_109 : f32 to vector<4x512xf32>
    %295 = arith.select %293, %291, %294 : vector<4x512xi1>, vector<4x512xf32>
    %296 = tpu.concatenate %256, %261, %266, %271, %275, %280, %285, %290, %295 in 0 : vector<4x512xf32>, vector<4x512xf32>, vector<4x512xf32>, vector<4x512xf32>, vector<4x512xf32>, vector<4x512xf32>, vector<4x512xf32>, vector<4x512xf32>, vector<4x512xf32> -> vector<36x512xf32>
    %297 = arith.truncf %296 : vector<36x512xf32> to vector<36x512xbf16>
    %c0_110 = arith.constant 0 : index
    %c0_111 = arith.constant 0 : index
    %298 = vector.load %arg4[%c0_110, %c0_111] : memref<4x36xbf16, #tpu.memory_space<vmem>>, vector<4x36xbf16>
    %cst_112 = arith.constant dense<0.000000e+00> : vector<4x512xf32>
    %299 = tpu.matmul %298, %297, %cst_112 {dimension_numbers = #tpu.dot_dimension_numbers<[1], [0], [0], [1], [0, 0, 1, 1], [], []>} : vector<4x36xbf16>, vector<36x512xbf16>, vector<4x512xf32> -> vector<4x512xf32>
    %cst_113 = arith.constant dense<0.000000e+00> : vector<4xf32>
    %300 = vector.multi_reduction <add>, %299, %cst_113 [1] : vector<4x512xf32> to vector<4xf32>
    %301 = vector.shape_cast %300 : vector<4xf32> to vector<4x1xf32>
    %302 = arith.mulf %299, %299 : vector<4x512xf32>
    %cst_114 = arith.constant dense<0.000000e+00> : vector<4xf32>
    %303 = vector.multi_reduction <add>, %302, %cst_114 [1] : vector<4x512xf32> to vector<4xf32>
    %304 = vector.shape_cast %303 : vector<4xf32> to vector<4x1xf32>
    %cst_115 = arith.constant 0.001953125 : f32
    %305 = vector.broadcast %cst_115 : f32 to vector<4x1xf32>
    %306 = arith.mulf %301, %305 : vector<4x1xf32>
    %cst_116 = arith.constant 0.001953125 : f32
    %307 = vector.broadcast %cst_116 : f32 to vector<4x1xf32>
    %308 = arith.mulf %304, %307 : vector<4x1xf32>
    %309 = arith.mulf %306, %306 : vector<4x1xf32>
    %310 = arith.subf %308, %309 : vector<4x1xf32>
    %c0_117 = arith.constant 0 : index
    %c0_118 = arith.constant 0 : index
    %311 = vector.load %arg5[%c0_117, %c0_118] : memref<4x1xf32, #tpu.memory_space<vmem>>, vector<4x1xf32>
    %cst_119 = arith.constant 9.99999974E-6 : f32
    %312 = vector.broadcast %cst_119 : f32 to vector<4x1xf32>
    %313 = arith.addf %310, %312 : vector<4x1xf32>
    %314 = math.rsqrt %313 : vector<4x1xf32>
    %315 = arith.mulf %311, %314 : vector<4x1xf32>
    %c0_120 = arith.constant 0 : index
    %c0_121 = arith.constant 0 : index
    %316 = vector.load %arg6[%c0_120, %c0_121] : memref<4x1xf32, #tpu.memory_space<vmem>>, vector<4x1xf32>
    %317 = arith.mulf %306, %315 : vector<4x1xf32>
    %318 = arith.subf %316, %317 : vector<4x1xf32>
    %319 = vector.broadcast %315 : vector<4x1xf32> to vector<4x512xf32>
    %320 = arith.mulf %299, %319 : vector<4x512xf32>
    %321 = vector.broadcast %318 : vector<4x1xf32> to vector<4x512xf32>
    %322 = arith.addf %320, %321 : vector<4x512xf32>
    %323 = arith.addf %322, %178 : vector<4x512xf32>
    %cst_122 = arith.constant 0.000000e+00 : f32
    %324 = vector.broadcast %cst_122 : f32 to vector<4x512xf32>
    %325 = arith.maximumf %323, %324 : vector<4x512xf32>
    %c0_123 = arith.constant 0 : index
    %c0_124 = arith.constant 0 : index
    %326 = vector.load %arg7[%c0_123, %c0_124] : memref<4x512xf32, #tpu.memory_space<vmem>>, vector<4x512xf32>
    tpu.vector_store %arg7[%c0_123, %c0_124], %325 {strides = array<i32>} : memref<4x512xf32, #tpu.memory_space<vmem>>, vector<4x512xf32>,
    return
  }
}

</mosaic_0001>

<llo_original>
// kernel: tpu_custom_call.1
$region0: #{tpu_custom_call.1}
  #allocation0 [shape = 'u32[]', space=smem, size = 0x4, offset = 0x4, fixed_abs, tag = 'smem constant byte address 0x4 - core index']
  #allocation1 [shape = 'u32[144,128]{1,0:T(1,128)}', space=vmem, size = 0x12000, scoped, tag = 'internal scratch']
  %s0 = inlined_call_operand.vmem [shape: f32[4,512], index: 0, kind: input, shape index: {}]
  %s1 = inlined_call_operand.vmem [shape: bf16[4,36], index: 1, kind: input, shape index: {}]
  %s2 = inlined_call_operand.vmem [shape: f32[4,1], index: 2, kind: input, shape index: {}]
  %s3 = inlined_call_operand.vmem [shape: f32[4,1], index: 3, kind: input, shape index: {}]
  %s4 = inlined_call_operand.vmem [shape: bf16[4,36], index: 4, kind: input, shape index: {}]
  %s5 = inlined_call_operand.vmem [shape: f32[4,1], index: 5, kind: input, shape index: {}]
  %s6 = inlined_call_operand.vmem [shape: f32[4,1], index: 6, kind: input, shape index: {}]
  %s7 = inlined_call_operand.hbm [shape: f32[4,512], index: 7, kind: output, shape index: {}]
  %s8 = sld [smem:[#allocation0]]
  $region38: #{tpu_custom_call.1} parent=0
    _
  %s10 = ssub.s32 1, %s8
  %s11 = scalar_select 0, %s10, %s8
  $region1: #{tpu_custom_call.1} parent=0
    #allocation2 [shape = 'u8[8192]{0}', space=vmem, size = 0x2000, scoped, tag = 'output window, operand 0, single buffered']
    #allocation3 [shape = 's32[1]{0}', space=sflag, size = 0x4, scoped, tag = 'scoped memory for tpu_custom_call.1']
    %12 = vsyncpa [#allocation3], 0
    // Predicated region
    $region2: #{tpu_custom_call.1} parent=1 // pred_check
      _
    $region3: #{tpu_custom_call.1} parent=1 // pred_check_branch
      %14 = sbr.rel (0) target = $region5
    $region4: #{tpu_custom_call.1} parent=1 // pred_region
      _
    $region5: #{tpu_custom_call.1} parent=1 // pred_fallthru
      _
    // Predicated region
    $region6: #{tpu_custom_call.1} parent=1 // pred_check
      _
    $region7: #{tpu_custom_call.1} parent=1 // pred_check_branch
      %16 = sbr.rel (0) target = $region9
    $region8: #{tpu_custom_call.1} parent=1 // pred_region
      _
    $region9: #{tpu_custom_call.1} parent=1 // pred_fallthru
      _
    // Predicated region
    $region10: #{tpu_custom_call.1} parent=1 // pred_check
      _
    $region11: #{tpu_custom_call.1} parent=1 // pred_check_branch
      %18 = sbr.rel (0) target = $region13
    $region12: #{tpu_custom_call.1} parent=1 // pred_region
      _
    $region13: #{tpu_custom_call.1} parent=1 // pred_fallthru
      _
    // Predicated region
    $region14: #{tpu_custom_call.1} parent=1 // pred_check
      _
    $region15: #{tpu_custom_call.1} parent=1 // pred_check_branch
      %20 = sbr.rel (0) target = $region17
    $region16: #{tpu_custom_call.1} parent=1 // pred_region
      _
    $region17: #{tpu_custom_call.1} parent=1 // pred_fallthru
      _
    // Predicated region
    $region18: #{tpu_custom_call.1} parent=1 // pred_check
      _
    $region19: #{tpu_custom_call.1} parent=1 // pred_check_branch
      %22 = sbr.rel (0) target = $region21
    $region20: #{tpu_custom_call.1} parent=1 // pred_region
      _
    $region21: #{tpu_custom_call.1} parent=1 // pred_fallthru
      _
    // Predicated region
    $region22: #{tpu_custom_call.1} parent=1 // pred_check
      _
    $region23: #{tpu_custom_call.1} parent=1 // pred_check_branch
      %24 = sbr.rel (0) target = $region25
    $region24: #{tpu_custom_call.1} parent=1 // pred_region
      _
    $region25: #{tpu_custom_call.1} parent=1 // pred_fallthru
      _
    // Predicated region
    $region26: #{tpu_custom_call.1} parent=1 // pred_check
      _
    $region27: #{tpu_custom_call.1} parent=1 // pred_check_branch
      %26 = sbr.rel (0) target = $region29
    $region28: #{tpu_custom_call.1} parent=1 // pred_region
      _
    $region29: #{tpu_custom_call.1} parent=1 // pred_fallthru
      _
    %v28 = vlaneseq
    %v29 = vand.u32 %v28, 127
    %v30 = vadd.s32 %v29, 128
    %v31 = vadd.s32 %v29, 256
    %v32 = vadd.s32 %v29, 384
    %v33 = vand.u32 %v29, 255
    %v34 = vand.u32 %v30, 255
    %v35 = vand.u32 %v31, 255
    %v36 = vand.u32 %v32, 255
    %v37 = vshra.s32 %v33, 4
    %v38 = vshra.s32 %v34, 4
    %v39 = vshra.s32 %v35, 4
    %v40 = vshra.s32 %v36, 4
    %v41 = vand.u32 %v33, 15
    %v42 = vand.u32 %v34, 15
    %v43 = vand.u32 %v35, 15
    %v44 = vand.u32 %v36, 15
    %v45 = vadd.s32 %v37, 4294967295
    %v46 = vadd.s32 %v38, 4294967295
    %v47 = vadd.s32 %v39, 4294967295
    %v48 = vadd.s32 %v40, 4294967295
    %vm49 = vcmp.ge.s32.totalorder %v45, 0
    %vm50 = vcmp.ge.s32.totalorder %v46, 0
    %vm51 = vcmp.ge.s32.totalorder %v47, 0
    %vm52 = vcmp.ge.s32.totalorder %v48, 0
    %vm53 = vcmp.lt.s32.totalorder %v45, 16
    %vm54 = vcmp.lt.s32.totalorder %v46, 16
    %vm55 = vcmp.lt.s32.totalorder %v47, 16
    %vm56 = vcmp.lt.s32.totalorder %v48, 16
    %vm57 = vmand %vm49, %vm53
    %vm58 = vmand %vm50, %vm54
    %vm59 = vmand %vm51, %vm55
    %vm60 = vmand %vm52, %vm56
    %v61 = vadd.s32 %v41, 4294967295
    %v62 = vadd.s32 %v42, 4294967295
    %v63 = vadd.s32 %v43, 4294967295
    %v64 = vadd.s32 %v44, 4294967295
    %vm65 = vcmp.ge.s32.totalorder %v61, 0
    %vm66 = vcmp.ge.s32.totalorder %v62, 0
    %vm67 = vcmp.ge.s32.totalorder %v63, 0
    %vm68 = vcmp.ge.s32.totalorder %v64, 0
    %vm69 = vmand %vm57, %vm65
    %vm70 = vmand %vm58, %vm66
    %vm71 = vmand %vm59, %vm67
    %vm72 = vmand %vm60, %vm68
    %vm73 = vcmp.lt.s32.totalorder %v61, 16
    %vm74 = vcmp.lt.s32.totalorder %v62, 16
    %vm75 = vcmp.lt.s32.totalorder %v63, 16
    %vm76 = vcmp.lt.s32.totalorder %v64, 16
    %vm77 = vmand %vm69, %vm73
    %vm78 = vmand %vm70, %vm74
    %vm79 = vmand %vm71, %vm75
    %vm80 = vmand %vm72, %vm76
    %vm81 = vcmp.ge.s32.totalorder %v41, 0
    %vm82 = vcmp.ge.s32.totalorder %v42, 0
    %vm83 = vcmp.ge.s32.totalorder %v43, 0
    %vm84 = vcmp.ge.s32.totalorder %v44, 0
    %vm85 = vmand %vm57, %vm81
    %vm86 = vmand %vm58, %vm82
    %vm87 = vmand %vm59, %vm83
    %vm88 = vmand %vm60, %vm84
    %vm89 = vcmp.lt.s32.totalorder %v41, 16
    %vm90 = vcmp.lt.s32.totalorder %v42, 16
    %vm91 = vcmp.lt.s32.totalorder %v43, 16
    %vm92 = vcmp.lt.s32.totalorder %v44, 16
    %vm93 = vmand %vm85, %vm89
    %vm94 = vmand %vm86, %vm90
    %vm95 = vmand %vm87, %vm91
    %vm96 = vmand %vm88, %vm92
    %v97 = vadd.s32 %v41, 1
    %v98 = vadd.s32 %v42, 1
    %v99 = vadd.s32 %v43, 1
    %v100 = vadd.s32 %v44, 1
    %vm101 = vcmp.ge.s32.totalorder %v97, 0
    %vm102 = vcmp.ge.s32.totalorder %v98, 0
    %vm103 = vcmp.ge.s32.totalorder %v99, 0
    %vm104 = vcmp.ge.s32.totalorder %v100, 0
    %vm105 = vmand %vm57, %vm101
    %vm106 = vmand %vm58, %vm102
    %vm107 = vmand %vm59, %vm103
    %vm108 = vmand %vm60, %vm104
    %vm109 = vcmp.lt.s32.totalorder %v97, 16
    %vm110 = vcmp.lt.s32.totalorder %v98, 16
    %vm111 = vcmp.lt.s32.totalorder %v99, 16
    %vm112 = vcmp.lt.s32.totalorder %v100, 16
    %vm113 = vmand %vm105, %vm109
    %vm114 = vmand %vm106, %vm110
    %vm115 = vmand %vm107, %vm111
    %vm116 = vmand %vm108, %vm112
    %vm117 = vcmp.ge.s32.totalorder %v37, 0
    %vm118 = vcmp.ge.s32.totalorder %v38, 0
    %vm119 = vcmp.ge.s32.totalorder %v39, 0
    %vm120 = vcmp.ge.s32.totalorder %v40, 0
    %vm121 = vcmp.lt.s32.totalorder %v37, 16
    %vm122 = vcmp.lt.s32.totalorder %v38, 16
    %vm123 = vcmp.lt.s32.totalorder %v39, 16
    %vm124 = vcmp.lt.s32.totalorder %v40, 16
    %vm125 = vmand %vm117, %vm121
    %vm126 = vmand %vm118, %vm122
    %vm127 = vmand %vm119, %vm123
    %vm128 = vmand %vm120, %vm124
    %vm129 = vmand %vm125, %vm65
    %vm130 = vmand %vm126, %vm66
    %vm131 = vmand %vm127, %vm67
    %vm132 = vmand %vm128, %vm68
    %vm133 = vmand %vm129, %vm73
    %vm134 = vmand %vm130, %vm74
    %vm135 = vmand %vm131, %vm75
    %vm136 = vmand %vm132, %vm76
    %vm137 = vmand %vm125, %vm81
    %vm138 = vmand %vm126, %vm82
    %vm139 = vmand %vm127, %vm83
    %vm140 = vmand %vm128, %vm84
    %vm141 = vmand %vm137, %vm89
    %vm142 = vmand %vm138, %vm90
    %vm143 = vmand %vm139, %vm91
    %vm144 = vmand %vm140, %vm92
    %vm145 = vmand %vm125, %vm101
    %vm146 = vmand %vm126, %vm102
    %vm147 = vmand %vm127, %vm103
    %vm148 = vmand %vm128, %vm104
    %vm149 = vmand %vm145, %vm109
    %vm150 = vmand %vm146, %vm110
    %vm151 = vmand %vm147, %vm111
    %vm152 = vmand %vm148, %vm112
    %v153 = vadd.s32 %v37, 1
    %v154 = vadd.s32 %v38, 1
    %v155 = vadd.s32 %v39, 1
    %v156 = vadd.s32 %v40, 1
    %vm157 = vcmp.ge.s32.totalorder %v153, 0
    %vm158 = vcmp.ge.s32.totalorder %v154, 0
    %vm159 = vcmp.ge.s32.totalorder %v155, 0
    %vm160 = vcmp.ge.s32.totalorder %v156, 0
    %vm161 = vcmp.lt.s32.totalorder %v153, 16
    %vm162 = vcmp.lt.s32.totalorder %v154, 16
    %vm163 = vcmp.lt.s32.totalorder %v155, 16
    %vm164 = vcmp.lt.s32.totalorder %v156, 16
    %vm165 = vmand %vm157, %vm161
    %vm166 = vmand %vm158, %vm162
    %vm167 = vmand %vm159, %vm163
    %vm168 = vmand %vm160, %vm164
    %vm169 = vmand %vm165, %vm65
    %vm170 = vmand %vm166, %vm66
    %vm171 = vmand %vm167, %vm67
    %vm172 = vmand %vm168, %vm68
    %vm173 = vmand %vm169, %vm73
    %vm174 = vmand %vm170, %vm74
    %vm175 = vmand %vm171, %vm75
    %vm176 = vmand %vm172, %vm76
    %vm177 = vmand %vm165, %vm81
    %vm178 = vmand %vm166, %vm82
    %vm179 = vmand %vm167, %vm83
    %vm180 = vmand %vm168, %vm84
    %vm181 = vmand %vm177, %vm89
    %vm182 = vmand %vm178, %vm90
    %vm183 = vmand %vm179, %vm91
    %vm184 = vmand %vm180, %vm92
    %vm185 = vmand %vm165, %vm101
    %vm186 = vmand %vm166, %vm102
    %vm187 = vmand %vm167, %vm103
    %vm188 = vmand %vm168, %vm104
    %vm189 = vmand %vm185, %vm109
    %vm190 = vmand %vm186, %vm110
    %vm191 = vmand %vm187, %vm111
    %vm192 = vmand %vm188, %vm112
    %v193 = vld [vmem:[%s0] sm:$0xff]
    %v194 = vld [vmem:[%s0 + $0x8] sm:$0xff]
    %v197 = vcombine.high %v193, %v193
    %v198 = vcombine.high %v194, %v194
    %201 = vrot.lane.b32.xlu0 %v193, 17
    %v202 = vpop.permute.xlu0 %201
    %203 = vrot.lane.b32.xlu0 %v197, 17
    %v204 = vpop.permute.xlu0 %203
    %205 = vrot.lane.b32.xlu0 %v194, 17
    %v206 = vpop.permute.xlu0 %205
    %207 = vrot.lane.b32.xlu0 %v198, 17
    %v208 = vpop.permute.xlu0 %207
    %vm209 = vcmp.lt.s32.totalorder %v29, 17
    %v210 = vsel %vm209, %v206, %v208
    %v211 = vsel %vm209, %v204, %v206
    %v212 = vsel %vm209, %v202, %v204
    %v213 = vsel %vm209, %v208, %v202
    %v214 = vsel %vm77, 1, 0
    %v215 = vsel %vm78, 1, 0
    %v216 = vsel %vm79, 1, 0
    %v217 = vsel %vm80, 1, 0
    %vm218 = vcmp.eq.s32.totalorder %v214, 1
    %vm219 = vcmp.eq.s32.totalorder %v215, 1
    %vm220 = vcmp.eq.s32.totalorder %v216, 1
    %vm221 = vcmp.eq.s32.totalorder %v217, 1
    %v222 = vsel %vm218, %v213, 0.0
    %v223 = vsel %vm219, %v212, 0.0
    %v224 = vsel %vm220, %v211, 0.0
    %v225 = vsel %vm221, %v210, 0.0
    %226 = vrot.lane.b32.xlu0 %v193, 16
    %v227 = vpop.permute.xlu0 %226
    %228 = vrot.lane.b32.xlu0 %v197, 16
    %v229 = vpop.permute.xlu0 %228
    %230 = vrot.lane.b32.xlu0 %v194, 16
    %v231 = vpop.permute.xlu0 %230
    %232 = vrot.lane.b32.xlu0 %v198, 16
    %v233 = vpop.permute.xlu0 %232
    %vm234 = vcmp.lt.s32.totalorder %v29, 16
    %v235 = vsel %vm234, %v231, %v233
    %v236 = vsel %vm234, %v229, %v231
    %v237 = vsel %vm234, %v227, %v229
    %v238 = vsel %vm234, %v233, %v227
    %v239 = vsel %vm93, 1, 0
    %v240 = vsel %vm94, 1, 0
    %v241 = vsel %vm95, 1, 0
    %v242 = vsel %vm96, 1, 0
    %vm243 = vcmp.eq.s32.totalorder %v239, 1
    %vm244 = vcmp.eq.s32.totalorder %v240, 1
    %vm245 = vcmp.eq.s32.totalorder %v241, 1
    %vm246 = vcmp.eq.s32.totalorder %v242, 1
    %v247 = vsel %vm243, %v238, 0.0
    %v248 = vsel %vm244, %v237, 0.0
    %v249 = vsel %vm245, %v236, 0.0
    %v250 = vsel %vm246, %v235, 0.0
    %251 = vrot.lane.b32.xlu0 %v193, 15
    %v252 = vpop.permute.xlu0 %251
    %253 = vrot.lane.b32.xlu0 %v197, 15
    %v254 = vpop.permute.xlu0 %253
    %255 = vrot.lane.b32.xlu0 %v194, 15
    %v256 = vpop.permute.xlu0 %255
    %257 = vrot.lane.b32.xlu0 %v198, 15
    %v258 = vpop.permute.xlu0 %257
    %vm259 = vcmp.lt.s32.totalorder %v29, 15
    %v260 = vsel %vm259, %v256, %v258
    %v261 = vsel %vm259, %v254, %v256
    %v262 = vsel %vm259, %v252, %v254
    %v263 = vsel %vm259, %v258, %v252
    %v264 = vsel %vm113, 1, 0
    %v265 = vsel %vm114, 1, 0
    %v266 = vsel %vm115, 1, 0
    %v267 = vsel %vm116, 1, 0
    %vm268 = vcmp.eq.s32.totalorder %v264, 1
    %vm269 = vcmp.eq.s32.totalorder %v265, 1
    %vm270 = vcmp.eq.s32.totalorder %v266, 1
    %vm271 = vcmp.eq.s32.totalorder %v267, 1
    %v272 = vsel %vm268, %v263, 0.0
    %v273 = vsel %vm269, %v262, 0.0
    %v274 = vsel %vm270, %v261, 0.0
    %v275 = vsel %vm271, %v260, 0.0
    %276 = vrot.lane.b32.xlu0 %v193, 1
    %v277 = vpop.permute.xlu0 %276
    %278 = vrot.lane.b32.xlu0 %v197, 1
    %v279 = vpop.permute.xlu0 %278
    %280 = vrot.lane.b32.xlu0 %v194, 1
    %v281 = vpop.permute.xlu0 %280
    %282 = vrot.lane.b32.xlu0 %v198, 1
    %v283 = vpop.permute.xlu0 %282
    %vm284 = vcmp.lt.s32.totalorder %v29, 1
    %v285 = vsel %vm284, %v281, %v283
    %v286 = vsel %vm284, %v279, %v281
    %v287 = vsel %vm284, %v277, %v279
    %v288 = vsel %vm284, %v283, %v277
    %v289 = vsel %vm133, 1, 0
    %v290 = vsel %vm134, 1, 0
    %v291 = vsel %vm135, 1, 0
    %v292 = vsel %vm136, 1, 0
    %vm293 = vcmp.eq.s32.totalorder %v289, 1
    %vm294 = vcmp.eq.s32.totalorder %v290, 1
    %vm295 = vcmp.eq.s32.totalorder %v291, 1
    %vm296 = vcmp.eq.s32.totalorder %v292, 1
    %v297 = vsel %vm293, %v288, 0.0
    %v298 = vsel %vm294, %v287, 0.0
    %v299 = vsel %vm295, %v286, 0.0
    %v300 = vsel %vm296, %v285, 0.0
    %v301 = vsel %vm141, 1, 0
    %v302 = vsel %vm142, 1, 0
    %v303 = vsel %vm143, 1, 0
    %v304 = vsel %vm144, 1, 0
    %vm305 = vcmp.eq.s32.totalorder %v301, 1
    %vm306 = vcmp.eq.s32.totalorder %v302, 1
    %vm307 = vcmp.eq.s32.totalorder %v303, 1
    %vm308 = vcmp.eq.s32.totalorder %v304, 1
    %v309 = vsel %vm305, %v193, 0.0
    %v310 = vsel %vm306, %v197, 0.0
    %v311 = vsel %vm307, %v194, 0.0
    %v312 = vsel %vm308, %v198, 0.0
    %313 = vrot.lane.b32.xlu0 %v193, 127
    %v314 = vpop.permute.xlu0 %313
    %315 = vrot.lane.b32.xlu0 %v197, 127
    %v316 = vpop.permute.xlu0 %315
    %317 = vrot.lane.b32.xlu0 %v194, 127
    %v318 = vpop.permute.xlu0 %317
    %319 = vrot.lane.b32.xlu0 %v198, 127
    %v320 = vpop.permute.xlu0 %319
    %vm321 = vcmp.lt.s32.totalorder %v29, 127
    %v322 = vsel %vm321, %v318, %v320
    %v323 = vsel %vm321, %v316, %v318
    %v324 = vsel %vm321, %v314, %v316
    %v325 = vsel %vm321, %v320, %v314
    %v326 = vsel %vm149, 1, 0
    %v327 = vsel %vm150, 1, 0
    %v328 = vsel %vm151, 1, 0
    %v329 = vsel %vm152, 1, 0
    %vm330 = vcmp.eq.s32.totalorder %v326, 1
    %vm331 = vcmp.eq.s32.totalorder %v327, 1
    %vm332 = vcmp.eq.s32.totalorder %v328, 1
    %vm333 = vcmp.eq.s32.totalorder %v329, 1
    %v334 = vsel %vm330, %v324, 0.0
    %v335 = vsel %vm331, %v323, 0.0
    %v336 = vsel %vm332, %v322, 0.0
    %v337 = vsel %vm333, %v325, 0.0
    %338 = vrot.lane.b32.xlu0 %v193, 113
    %v339 = vpop.permute.xlu0 %338
    %340 = vrot.lane.b32.xlu0 %v197, 113
    %v341 = vpop.permute.xlu0 %340
    %342 = vrot.lane.b32.xlu0 %v194, 113
    %v343 = vpop.permute.xlu0 %342
    %344 = vrot.lane.b32.xlu0 %v198, 113
    %v345 = vpop.permute.xlu0 %344
    %vm346 = vcmp.lt.s32.totalorder %v29, 113
    %v347 = vsel %vm346, %v343, %v345
    %v348 = vsel %vm346, %v341, %v343
    %v349 = vsel %vm346, %v339, %v341
    %v350 = vsel %vm346, %v345, %v339
    %v351 = vsel %vm173, 1, 0
    %v352 = vsel %vm174, 1, 0
    %v353 = vsel %vm175, 1, 0
    %v354 = vsel %vm176, 1, 0
    %vm355 = vcmp.eq.s32.totalorder %v351, 1
    %vm356 = vcmp.eq.s32.totalorder %v352, 1
    %vm357 = vcmp.eq.s32.totalorder %v353, 1
    %vm358 = vcmp.eq.s32.totalorder %v354, 1
    %v359 = vsel %vm355, %v349, 0.0
    %v360 = vsel %vm356, %v348, 0.0
    %v361 = vsel %vm357, %v347, 0.0
    %v362 = vsel %vm358, %v350, 0.0
    %363 = vrot.lane.b32.xlu0 %v193, 112
    %v364 = vpop.permute.xlu0 %363
    %365 = vrot.lane.b32.xlu0 %v197, 112
    %v366 = vpop.permute.xlu0 %365
    %367 = vrot.lane.b32.xlu0 %v194, 112
    %v368 = vpop.permute.xlu0 %367
    %369 = vrot.lane.b32.xlu0 %v198, 112
    %v370 = vpop.permute.xlu0 %369
    %vm371 = vcmp.lt.s32.totalorder %v29, 112
    %v372 = vsel %vm371, %v368, %v370
    %v373 = vsel %vm371, %v366, %v368
    %v374 = vsel %vm371, %v364, %v366
    %v375 = vsel %vm371, %v370, %v364
    %v376 = vsel %vm181, 1, 0
    %v377 = vsel %vm182, 1, 0
    %v378 = vsel %vm183, 1, 0
    %v379 = vsel %vm184, 1, 0
    %vm380 = vcmp.eq.s32.totalorder %v376, 1
    %vm381 = vcmp.eq.s32.totalorder %v377, 1
    %vm382 = vcmp.eq.s32.totalorder %v378, 1
    %vm383 = vcmp.eq.s32.totalorder %v379, 1
    %v384 = vsel %vm380, %v374, 0.0
    %v385 = vsel %vm381, %v373, 0.0
    %v386 = vsel %vm382, %v372, 0.0
    %v387 = vsel %vm383, %v375, 0.0
    %388 = vrot.lane.b32.xlu0 %v193, 111
    %v389 = vpop.permute.xlu0 %388
    %390 = vrot.lane.b32.xlu0 %v197, 111
    %v391 = vpop.permute.xlu0 %390
    %392 = vrot.lane.b32.xlu0 %v194, 111
    %v393 = vpop.permute.xlu0 %392
    %394 = vrot.lane.b32.xlu0 %v198, 111
    %v395 = vpop.permute.xlu0 %394
    %vm396 = vcmp.lt.s32.totalorder %v29, 111
    %v397 = vsel %vm396, %v393, %v395
    %v398 = vsel %vm396, %v391, %v393
    %v399 = vsel %vm396, %v389, %v391
    %v400 = vsel %vm396, %v395, %v389
    %v401 = vsel %vm189, 1, 0
    %v402 = vsel %vm190, 1, 0
    %v403 = vsel %vm191, 1, 0
    %v404 = vsel %vm192, 1, 0
    %vm405 = vcmp.eq.s32.totalorder %v401, 1
    %vm406 = vcmp.eq.s32.totalorder %v402, 1
    %vm407 = vcmp.eq.s32.totalorder %v403, 1
    %vm408 = vcmp.eq.s32.totalorder %v404, 1
    %v409 = vsel %vm405, %v399, 0.0
    %v410 = vsel %vm406, %v398, 0.0
    %v411 = vsel %vm407, %v397, 0.0
    %v412 = vsel %vm408, %v400, 0.0
    %v417 = vrot.slane %v247, 4
    %v418 = vrot.slane %v248, 4
    %v419 = vrot.slane %v249, 4
    %v420 = vrot.slane %v250, 4
    %v429 = vrot.slane %v297, 4
    %v430 = vrot.slane %v298, 4
    %v431 = vrot.slane %v299, 4
    %v432 = vrot.slane %v300, 4
    %v441 = vrot.slane %v334, 4
    %v442 = vrot.slane %v335, 4
    %v443 = vrot.slane %v336, 4
    %v444 = vrot.slane %v337, 4
    %v453 = vrot.slane %v384, 4
    %v454 = vrot.slane %v385, 4
    %v455 = vrot.slane %v386, 4
    %v456 = vrot.slane %v387, 4
    %vm461 = vcmask 1043456
    %v462 = vsel %vm461, %v222, %v417
    %v463 = vsel %vm461, %v223, %v418
    %v464 = vsel %vm461, %v224, %v419
    %v465 = vsel %vm461, %v225, %v420
    %v466 = vsel %vm461, %v272, %v429
    %v467 = vsel %vm461, %v273, %v430
    %v468 = vsel %vm461, %v274, %v431
    %v469 = vsel %vm461, %v275, %v432
    %v470 = vsel %vm461, %v309, %v441
    %v471 = vsel %vm461, %v310, %v442
    %v472 = vsel %vm461, %v311, %v443
    %v473 = vsel %vm461, %v312, %v444
    %v474 = vsel %vm461, %v359, %v453
    %v475 = vsel %vm461, %v360, %v454
    %v476 = vsel %vm461, %v361, %v455
    %v477 = vsel %vm461, %v362, %v456
    %v478 = vpack.c.bf16 %v466, %v462
    %v479 = vpack.c.bf16 %v467, %v463
    %v480 = vpack.c.bf16 %v468, %v464
    %v481 = vpack.c.bf16 %v469, %v465
    %v482 = vpack.c.bf16 %v474, %v470
    %v483 = vpack.c.bf16 %v475, %v471
    %v484 = vpack.c.bf16 %v476, %v472
    %v485 = vpack.c.bf16 %v477, %v473
    %v486 = vpack.c.bf16 %v409, %v409
    %v487 = vpack.c.bf16 %v410, %v410
    %v488 = vpack.c.bf16 %v411, %v411
    %v489 = vpack.c.bf16 %v412, %v412
    %v490 = vld [vmem:[%s1] sm:$0x3]
    %vm491 = vcmask 293888
    %v493 = vsel %vm491, %v490, 0
    %vm495 = vcmask 1041408
    %v497 = vsel %vm495, %v486, 0
    %v500 = vsel %vm495, %v487, 0
    %v503 = vsel %vm495, %v488, 0
    %v506 = vsel %vm495, %v489, 0
    %508 = vmatprep.subr.bf16.mxu0 0
    %509 = vmatpush1.bf16.msra.mxu0 0
    %510 = vmatprep.subr.bf16.mxu0 0
    %511 = vmatpush1.bf16.msra.mxu0 0
    %512 = vmatprep.subr.bf16.mxu0 0
    %513 = vmatpush1.bf16.msra.mxu0 0
    %514 = vmatprep.subr.bf16.mxu0 0
    %515 = vmatpush1.bf16.msra.mxu0 0
    %516 = vmatprep.subr.bf16.mxu0 0
    %517 = vmatpush1.bf16.msra.mxu0 0
    %518 = vmatprep.subr.bf16.mxu0 %v500
    %519 = vmatpush1.bf16.msra.mxu0 %v497
    %520 = vmatprep.subr.bf16.mxu0 %v483
    %521 = vmatpush1.bf16.msra.mxu0 %v482
    %522 = vmatprep.subr.bf16.mxu0 %v479
    %523 = vmatpush1.bf16.msra.mxu0 %v478
    %524 = vmatprep.subr.bf16.mxu0 0
    %525 = vmatpush2.bf16.msra.mxu0 0
    %526 = vmatprep.subr.bf16.mxu0 0
    %527 = vmatpush2.bf16.msra.mxu0 0
    %528 = vmatprep.subr.bf16.mxu0 0
    %529 = vmatpush2.bf16.msra.mxu0 0
    %530 = vmatprep.subr.bf16.mxu0 0
    %531 = vmatpush2.bf16.msra.mxu0 0
    %532 = vmatprep.subr.bf16.mxu0 0
    %533 = vmatpush2.bf16.msra.mxu0 0
    %534 = vmatprep.subr.bf16.mxu0 0
    %535 = vmatpush2.bf16.msra.mxu0 0
    %536 = vmatprep.subr.bf16.mxu0 0
    %537 = vmatpush2.bf16.msra.mxu0 0
    %538 = vmatprep.subr.bf16.mxu0 0
    %539 = vmatpush2.bf16.msra.mxu0 0
    %540 = vmatprep.mubr.bf16.mxu0 0
    %541 = vmatmul.mubr.bf16.gmra.mxu0 %v493
    %v542 = vpop.f32.mrf.mxu0
    %v543 = vadd.f32 0.0, %v542
    %v544 = vpop.f32.mrf.mxu0
    %v545 = vadd.f32 0.0, %v544
    %v546 = vpop.f32.mrf.mxu0
    %v547 = vpop.f32.mrf.mxu0
    %548 = vdwg.mxu0
    %549 = vmatprep.subr.bf16.mxu0 0
    %550 = vmatpush1.bf16.msra.mxu0 0
    %551 = vmatprep.subr.bf16.mxu0 0
    %552 = vmatpush1.bf16.msra.mxu0 0
    %553 = vmatprep.subr.bf16.mxu0 0
    %554 = vmatpush1.bf16.msra.mxu0 0
    %555 = vmatprep.subr.bf16.mxu0 0
    %556 = vmatpush1.bf16.msra.mxu0 0
    %557 = vmatprep.subr.bf16.mxu0 0
    %558 = vmatpush1.bf16.msra.mxu0 0
    %559 = vmatprep.subr.bf16.mxu0 %v506
    %560 = vmatpush1.bf16.msra.mxu0 %v503
    %561 = vmatprep.subr.bf16.mxu0 %v485
    %562 = vmatpush1.bf16.msra.mxu0 %v484
    %563 = vmatprep.subr.bf16.mxu0 %v481
    %564 = vmatpush1.bf16.msra.mxu0 %v480
    %565 = vmatprep.subr.bf16.mxu0 0
    %566 = vmatpush2.bf16.msra.mxu0 0
    %567 = vmatprep.subr.bf16.mxu0 0
    %568 = vmatpush2.bf16.msra.mxu0 0
    %569 = vmatprep.subr.bf16.mxu0 0
    %570 = vmatpush2.bf16.msra.mxu0 0
    %571 = vmatprep.subr.bf16.mxu0 0
    %572 = vmatpush2.bf16.msra.mxu0 0
    %573 = vmatprep.subr.bf16.mxu0 0
    %574 = vmatpush2.bf16.msra.mxu0 0
    %575 = vmatprep.subr.bf16.mxu0 0
    %576 = vmatpush2.bf16.msra.mxu0 0
    %577 = vmatprep.subr.bf16.mxu0 0
    %578 = vmatpush2.bf16.msra.mxu0 0
    %579 = vmatprep.subr.bf16.mxu0 0
    %580 = vmatpush2.bf16.msra.mxu0 0
    %581 = vmatprep.mubr.bf16.mxu0 0
    %582 = vmatmul.mubr.bf16.gmra.mxu0 %v493
    %v583 = vpop.f32.mrf.mxu0
    %v584 = vadd.f32 0.0, %v583
    %v585 = vpop.f32.mrf.mxu0
    %v586 = vadd.f32 0.0, %v585
    %v587 = vpop.f32.mrf.mxu0
    %v588 = vpop.f32.mrf.mxu0
    %589 = vdwg.mxu0
    %v590 = vsel %vm461, %v543, 0.0
    %v591 = vsel %vm461, %v545, 0.0
    %v592 = vadd.f32 %v590, %v591
    %v593 = vsel %vm461, %v584, 0.0
    %v594 = vadd.f32 %v592, %v593
    %v595 = vsel %vm461, %v586, 0.0
    %v596 = vadd.f32 %v594, %v595
    %597 = vadd.xlane.f32.xlu0 %v596
    %v598 = vpop.xlane.xlu0 %597
    %v599 = vmul.f32 %v543, %v543
    %v600 = vmul.f32 %v545, %v545
    %v601 = vmul.f32 %v584, %v584
    %v602 = vmul.f32 %v586, %v586
    %v603 = vsel %vm461, %v599, 0.0
    %v604 = vsel %vm461, %v600, 0.0
    %v605 = vadd.f32 %v603, %v604
    %v606 = vsel %vm461, %v601, 0.0
    %v607 = vadd.f32 %v605, %v606
    %v608 = vsel %vm461, %v602, 0.0
    %v609 = vadd.f32 %v607, %v608
    %610 = vadd.xlane.f32.xlu0 %v609
    %v611 = vpop.xlane.xlu0 %610
    %v612 = vmul.f32 %v598, 0.001953125
    %v613 = vmul.f32 %v611, 0.001953125
    %v614 = vmul.f32 %v612, %v612
    %v615 = vsub.f32 %v613, %v614
    %v616 = vld [vmem:[%s2] sm:$0xf]
    %v617 = vadd.f32 %v615, 1e-05
    %v618 = vrsqrt.pop %v617
    %v619 = vmul.f32 %v616, %v618
    %v620 = vld [vmem:[%s3] sm:$0xf]
    %v621 = vmul.f32 %v612, %v619
    %v622 = vsub.f32 %v620, %v621
    %624 = vset.pattern.permute.xlu0 0
    %625 = vperm.xlu0 %624, %v619
    %v626 = vpop.permute.xlu0 %625
    %v628 = vmul.f32 %v543, %v626
    %v629 = vmul.f32 %v545, %v626
    %v630 = vmul.f32 %v584, %v626
    %v631 = vmul.f32 %v586, %v626
    %633 = vset.pattern.permute.xlu0 0
    %634 = vperm.xlu0 %633, %v622
    %v635 = vpop.permute.xlu0 %634
    %v637 = vadd.f32 %v628, %v635
    %v638 = vadd.f32 %v629, %v635
    %v639 = vadd.f32 %v630, %v635
    %v640 = vadd.f32 %v631, %v635
    %v641 = vmax.f32 %v637, 0.0
    %v642 = vmax.f32 %v638, 0.0
    %v643 = vmax.f32 %v639, 0.0
    %v644 = vmax.f32 %v640, 0.0
    %645 = vrot.lane.b32.xlu0 %v641, 17
    %v646 = vpop.permute.xlu0 %645
    %647 = vrot.lane.b32.xlu0 %v642, 17
    %v648 = vpop.permute.xlu0 %647
    %649 = vrot.lane.b32.xlu0 %v643, 17
    %v650 = vpop.permute.xlu0 %649
    %651 = vrot.lane.b32.xlu0 %v644, 17
    %v652 = vpop.permute.xlu0 %651
    %v653 = vsel %vm209, %v650, %v652
    %v654 = vsel %vm209, %v648, %v650
    %v655 = vsel %vm209, %v646, %v648
    %v656 = vsel %vm209, %v652, %v646
    %v657 = vsel %vm218, %v656, 0.0
    %v658 = vsel %vm219, %v655, 0.0
    %v659 = vsel %vm220, %v654, 0.0
    %v660 = vsel %vm221, %v653, 0.0
    %661 = vrot.lane.b32.xlu0 %v641, 16
    %v662 = vpop.permute.xlu0 %661
    %663 = vrot.lane.b32.xlu0 %v642, 16
    %v664 = vpop.permute.xlu0 %663
    %665 = vrot.lane.b32.xlu0 %v643, 16
    %v666 = vpop.permute.xlu0 %665
    %667 = vrot.lane.b32.xlu0 %v644, 16
    %v668 = vpop.permute.xlu0 %667
    %v669 = vsel %vm234, %v666, %v668
    %v670 = vsel %vm234, %v664, %v666
    %v671 = vsel %vm234, %v662, %v664
    %v672 = vsel %vm234, %v668, %v662
    %v673 = vsel %vm243, %v672, 0.0
    %v674 = vsel %vm244, %v671, 0.0
    %v675 = vsel %vm245, %v670, 0.0
    %v676 = vsel %vm246, %v669, 0.0
    %677 = vrot.lane.b32.xlu0 %v641, 15
    %v678 = vpop.permute.xlu0 %677
    %679 = vrot.lane.b32.xlu0 %v642, 15
    %v680 = vpop.permute.xlu0 %679
    %681 = vrot.lane.b32.xlu0 %v643, 15
    %v682 = vpop.permute.xlu0 %681
    %683 = vrot.lane.b32.xlu0 %v644, 15
    %v684 = vpop.permute.xlu0 %683
    %v685 = vsel %vm259, %v682, %v684
    %v686 = vsel %vm259, %v680, %v682
    %v687 = vsel %vm259, %v678, %v680
    %v688 = vsel %vm259, %v684, %v678
    %v689 = vsel %vm268, %v688, 0.0
    %v690 = vsel %vm269, %v687, 0.0
    %v691 = vsel %vm270, %v686, 0.0
    %v692 = vsel %vm271, %v685, 0.0
    %693 = vrot.lane.b32.xlu0 %v641, 1
    %v694 = vpop.permute.xlu0 %693
    %695 = vrot.lane.b32.xlu0 %v642, 1
    %v696 = vpop.permute.xlu0 %695
    %697 = vrot.lane.b32.xlu0 %v643, 1
    %v698 = vpop.permute.xlu0 %697
    %699 = vrot.lane.b32.xlu0 %v644, 1
    %v700 = vpop.permute.xlu0 %699
    %v701 = vsel %vm284, %v698, %v700
    %v702 = vsel %vm284, %v696, %v698
    %v703 = vsel %vm284, %v694, %v696
    %v704 = vsel %vm284, %v700, %v694
    %v705 = vsel %vm293, %v704, 0.0
    %v706 = vsel %vm294, %v703, 0.0
    %v707 = vsel %vm295, %v702, 0.0
    %v708 = vsel %vm296, %v701, 0.0
    %v709 = vsel %vm305, %v641, 0.0
    %v710 = vsel %vm306, %v642, 0.0
    %v711 = vsel %vm307, %v643, 0.0
    %v712 = vsel %vm308, %v644, 0.0
    %713 = vrot.lane.b32.xlu0 %v641, 127
    %v714 = vpop.permute.xlu0 %713
    %715 = vrot.lane.b32.xlu0 %v642, 127
    %v716 = vpop.permute.xlu0 %715
    %717 = vrot.lane.b32.xlu0 %v643, 127
    %v718 = vpop.permute.xlu0 %717
    %719 = vrot.lane.b32.xlu0 %v644, 127
    %v720 = vpop.permute.xlu0 %719
    %v721 = vsel %vm321, %v718, %v720
    %v722 = vsel %vm321, %v716, %v718
    %v723 = vsel %vm321, %v714, %v716
    %v724 = vsel %vm321, %v720, %v714
    %v725 = vsel %vm330, %v723, 0.0
    %v726 = vsel %vm331, %v722, 0.0
    %v727 = vsel %vm332, %v721, 0.0
    %v728 = vsel %vm333, %v724, 0.0
    %729 = vrot.lane.b32.xlu0 %v641, 113
    %v730 = vpop.permute.xlu0 %729
    %731 = vrot.lane.b32.xlu0 %v642, 113
    %v732 = vpop.permute.xlu0 %731
    %733 = vrot.lane.b32.xlu0 %v643, 113
    %v734 = vpop.permute.xlu0 %733
    %735 = vrot.lane.b32.xlu0 %v644, 113
    %v736 = vpop.permute.xlu0 %735
    %v737 = vsel %vm346, %v734, %v736
    %v738 = vsel %vm346, %v732, %v734
    %v739 = vsel %vm346, %v730, %v732
    %v740 = vsel %vm346, %v736, %v730
    %v741 = vsel %vm355, %v739, 0.0
    %v742 = vsel %vm356, %v738, 0.0
    %v743 = vsel %vm357, %v737, 0.0
    %v744 = vsel %vm358, %v740, 0.0
    %745 = vrot.lane.b32.xlu0 %v641, 112
    %v746 = vpop.permute.xlu0 %745
    %747 = vrot.lane.b32.xlu0 %v642, 112
    %v748 = vpop.permute.xlu0 %747
    %749 = vrot.lane.b32.xlu0 %v643, 112
    %v750 = vpop.permute.xlu0 %749
    %751 = vrot.lane.b32.xlu0 %v644, 112
    %v752 = vpop.permute.xlu0 %751
    %v753 = vsel %vm371, %v750, %v752
    %v754 = vsel %vm371, %v748, %v750
    %v755 = vsel %vm371, %v746, %v748
    %v756 = vsel %vm371, %v752, %v746
    %v757 = vsel %vm380, %v755, 0.0
    %v758 = vsel %vm381, %v754, 0.0
    %v759 = vsel %vm382, %v753, 0.0
    %v760 = vsel %vm383, %v756, 0.0
    %761 = vrot.lane.b32.xlu0 %v641, 111
    %v762 = vpop.permute.xlu0 %761
    %763 = vrot.lane.b32.xlu0 %v642, 111
    %v764 = vpop.permute.xlu0 %763
    %765 = vrot.lane.b32.xlu0 %v643, 111
    %v766 = vpop.permute.xlu0 %765
    %767 = vrot.lane.b32.xlu0 %v644, 111
    %v768 = vpop.permute.xlu0 %767
    %v769 = vsel %vm396, %v766, %v768
    %v770 = vsel %vm396, %v764, %v766
    %v771 = vsel %vm396, %v762, %v764
    %v772 = vsel %vm396, %v768, %v762
    %v773 = vsel %vm405, %v771, 0.0
    %v774 = vsel %vm406, %v770, 0.0
    %v775 = vsel %vm407, %v769, 0.0
    %v776 = vsel %vm408, %v772, 0.0
    %v781 = vrot.slane %v673, 4
    %v782 = vrot.slane %v674, 4
    %v783 = vrot.slane %v675, 4
    %v784 = vrot.slane %v676, 4
    %v793 = vrot.slane %v705, 4
    %v794 = vrot.slane %v706, 4
    %v795 = vrot.slane %v707, 4
    %v796 = vrot.slane %v708, 4
    %v805 = vrot.slane %v725, 4
    %v806 = vrot.slane %v726, 4
    %v807 = vrot.slane %v727, 4
    %v808 = vrot.slane %v728, 4
    %v817 = vrot.slane %v757, 4
    %v818 = vrot.slane %v758, 4
    %v819 = vrot.slane %v759, 4
    %v820 = vrot.slane %v760, 4
    %v825 = vsel %vm461, %v657, %v781
    %v826 = vsel %vm461, %v658, %v782
    %v827 = vsel %vm461, %v659, %v783
    %v828 = vsel %vm461, %v660, %v784
    %v829 = vsel %vm461, %v689, %v793
    %v830 = vsel %vm461, %v690, %v794
    %v831 = vsel %vm461, %v691, %v795
    %v832 = vsel %vm461, %v692, %v796
    %v833 = vsel %vm461, %v709, %v805
    %v834 = vsel %vm461, %v710, %v806
    %v835 = vsel %vm461, %v711, %v807
    %v836 = vsel %vm461, %v712, %v808
    %v837 = vsel %vm461, %v741, %v817
    %v838 = vsel %vm461, %v742, %v818
    %v839 = vsel %vm461, %v743, %v819
    %v840 = vsel %vm461, %v744, %v820
    %v841 = vpack.c.bf16 %v829, %v825
    %v842 = vpack.c.bf16 %v830, %v826
    %v843 = vpack.c.bf16 %v831, %v827
    %v844 = vpack.c.bf16 %v832, %v828
    %v845 = vpack.c.bf16 %v837, %v833
    %v846 = vpack.c.bf16 %v838, %v834
    %v847 = vpack.c.bf16 %v839, %v835
    %v848 = vpack.c.bf16 %v840, %v836
    %v849 = vpack.c.bf16 %v773, %v773
    %v850 = vpack.c.bf16 %v774, %v774
    %v851 = vpack.c.bf16 %v775, %v775
    %v852 = vpack.c.bf16 %v776, %v776
    %v853 = vld [vmem:[%s4] sm:$0x3]
    %v855 = vsel %vm491, %v853, 0
    %v858 = vsel %vm495, %v849, 0
    %v861 = vsel %vm495, %v850, 0
    %v864 = vsel %vm495, %v851, 0
    %v867 = vsel %vm495, %v852, 0
    %869 = vmatprep.subr.bf16.mxu0 0
    %870 = vmatpush1.bf16.msra.mxu0 0
    %871 = vmatprep.subr.bf16.mxu0 0
    %872 = vmatpush1.bf16.msra.mxu0 0
    %873 = vmatprep.subr.bf16.mxu0 0
    %874 = vmatpush1.bf16.msra.mxu0 0
    %875 = vmatprep.subr.bf16.mxu0 0
    %876 = vmatpush1.bf16.msra.mxu0 0
    %877 = vmatprep.subr.bf16.mxu0 0
    %878 = vmatpush1.bf16.msra.mxu0 0
    %879 = vmatprep.subr.bf16.mxu0 %v861
    %880 = vmatpush1.bf16.msra.mxu0 %v858
    %881 = vmatprep.subr.bf16.mxu0 %v846
    %882 = vmatpush1.bf16.msra.mxu0 %v845
    %883 = vmatprep.subr.bf16.mxu0 %v842
    %884 = vmatpush1.bf16.msra.mxu0 %v841
    %885 = vmatprep.subr.bf16.mxu0 0
    %886 = vmatpush2.bf16.msra.mxu0 0
    %887 = vmatprep.subr.bf16.mxu0 0
    %888 = vmatpush2.bf16.msra.mxu0 0
    %889 = vmatprep.subr.bf16.mxu0 0
    %890 = vmatpush2.bf16.msra.mxu0 0
    %891 = vmatprep.subr.bf16.mxu0 0
    %892 = vmatpush2.bf16.msra.mxu0 0
    %893 = vmatprep.subr.bf16.mxu0 0
    %894 = vmatpush2.bf16.msra.mxu0 0
    %895 = vmatprep.subr.bf16.mxu0 0
    %896 = vmatpush2.bf16.msra.mxu0 0
    %897 = vmatprep.subr.bf16.mxu0 0
    %898 = vmatpush2.bf16.msra.mxu0 0
    %899 = vmatprep.subr.bf16.mxu0 0
    %900 = vmatpush2.bf16.msra.mxu0 0
    %901 = vmatprep.mubr.bf16.mxu0 0
    %902 = vmatmul.mubr.bf16.gmra.mxu0 %v855
    %v903 = vpop.f32.mrf.mxu0
    %v904 = vadd.f32 0.0, %v903
    %v905 = vpop.f32.mrf.mxu0
    %v906 = vadd.f32 0.0, %v905
    %v907 = vpop.f32.mrf.mxu0
    %v908 = vpop.f32.mrf.mxu0
    %909 = vdwg.mxu0
    %910 = vmatprep.subr.bf16.mxu0 0
    %911 = vmatpush1.bf16.msra.mxu0 0
    %912 = vmatprep.subr.bf16.mxu0 0
    %913 = vmatpush1.bf16.msra.mxu0 0
    %914 = vmatprep.subr.bf16.mxu0 0
    %915 = vmatpush1.bf16.msra.mxu0 0
    %916 = vmatprep.subr.bf16.mxu0 0
    %917 = vmatpush1.bf16.msra.mxu0 0
    %918 = vmatprep.subr.bf16.mxu0 0
    %919 = vmatpush1.bf16.msra.mxu0 0
    %920 = vmatprep.subr.bf16.mxu0 %v867
    %921 = vmatpush1.bf16.msra.mxu0 %v864
    %922 = vmatprep.subr.bf16.mxu0 %v848
    %923 = vmatpush1.bf16.msra.mxu0 %v847
    %924 = vmatprep.subr.bf16.mxu0 %v844
    %925 = vmatpush1.bf16.msra.mxu0 %v843
    %926 = vmatprep.subr.bf16.mxu0 0
    %927 = vmatpush2.bf16.msra.mxu0 0
    %928 = vmatprep.subr.bf16.mxu0 0
    %929 = vmatpush2.bf16.msra.mxu0 0
    %930 = vmatprep.subr.bf16.mxu0 0
    %931 = vmatpush2.bf16.msra.mxu0 0
    %932 = vmatprep.subr.bf16.mxu0 0
    %933 = vmatpush2.bf16.msra.mxu0 0
    %934 = vmatprep.subr.bf16.mxu0 0
    %935 = vmatpush2.bf16.msra.mxu0 0
    %936 = vmatprep.subr.bf16.mxu0 0
    %937 = vmatpush2.bf16.msra.mxu0 0
    %938 = vmatprep.subr.bf16.mxu0 0
    %939 = vmatpush2.bf16.msra.mxu0 0
    %940 = vmatprep.subr.bf16.mxu0 0
    %941 = vmatpush2.bf16.msra.mxu0 0
    %942 = vmatprep.mubr.bf16.mxu0 0
    %943 = vmatmul.mubr.bf16.gmra.mxu0 %v855
    %v944 = vpop.f32.mrf.mxu0
    %v945 = vadd.f32 0.0, %v944
    %v946 = vpop.f32.mrf.mxu0
    %v947 = vadd.f32 0.0, %v946
    %v948 = vpop.f32.mrf.mxu0
    %v949 = vpop.f32.mrf.mxu0
    %950 = vdwg.mxu0
    %v951 = vsel %vm461, %v904, 0.0
    %v952 = vsel %vm461, %v906, 0.0
    %v953 = vadd.f32 %v951, %v952
    %v954 = vsel %vm461, %v945, 0.0
    %v955 = vadd.f32 %v953, %v954
    %v956 = vsel %vm461, %v947, 0.0
    %v957 = vadd.f32 %v955, %v956
    %958 = vadd.xlane.f32.xlu0 %v957
    %v959 = vpop.xlane.xlu0 %958
    %v960 = vmul.f32 %v904, %v904
    %v961 = vmul.f32 %v906, %v906
    %v962 = vmul.f32 %v945, %v945
    %v963 = vmul.f32 %v947, %v947
    %v964 = vsel %vm461, %v960, 0.0
    %v965 = vsel %vm461, %v961, 0.0
    %v966 = vadd.f32 %v964, %v965
    %v967 = vsel %vm461, %v962, 0.0
    %v968 = vadd.f32 %v966, %v967
    %v969 = vsel %vm461, %v963, 0.0
    %v970 = vadd.f32 %v968, %v969
    %971 = vadd.xlane.f32.xlu0 %v970
    %v972 = vpop.xlane.xlu0 %971
    %v973 = vmul.f32 %v959, 0.001953125
    %v974 = vmul.f32 %v972, 0.001953125
    %v975 = vmul.f32 %v973, %v973
    %v976 = vsub.f32 %v974, %v975
    %v977 = vld [vmem:[%s5] sm:$0xf]
    %v978 = vadd.f32 %v976, 1e-05
    %v979 = vrsqrt.pop %v978
    %v980 = vmul.f32 %v977, %v979
    %v981 = vld [vmem:[%s6] sm:$0xf]
    %v982 = vmul.f32 %v973, %v980
    %v983 = vsub.f32 %v981, %v982
    %985 = vset.pattern.permute.xlu0 0
    %986 = vperm.xlu0 %985, %v980
    %v987 = vpop.permute.xlu0 %986
    %v989 = vmul.f32 %v904, %v987
    %v990 = vmul.f32 %v906, %v987
    %v991 = vmul.f32 %v945, %v987
    %v992 = vmul.f32 %v947, %v987
    %994 = vset.pattern.permute.xlu0 0
    %995 = vperm.xlu0 %994, %v983
    %v996 = vpop.permute.xlu0 %995
    %v998 = vadd.f32 %v989, %v996
    %v999 = vadd.f32 %v990, %v996
    %v1000 = vadd.f32 %v991, %v996
    %v1001 = vadd.f32 %v992, %v996
    %v1002 = vadd.f32 %v998, %v193
    %v1003 = vadd.f32 %v999, %v197
    %v1004 = vadd.f32 %v1000, %v194
    %v1005 = vadd.f32 %v1001, %v198
    %v1006 = vmax.f32 %v1002, 0.0
    %v1007 = vmax.f32 %v1003, 0.0
    %v1008 = vmax.f32 %v1004, 0.0
    %v1009 = vmax.f32 %v1005, 0.0
    %v1014 = vcombine.low %v1006, %v1007
    %v1015 = vcombine.low %v1008, %v1009
    %1018 = vst [vmem:[#allocation2] sm:$0xff] %v1014
    %1019 = vst [vmem:[#allocation2 + $0x8] sm:$0xff] %v1015
    // Predicated region
    $region30: #{tpu_custom_call.1} parent=1 // pred_check
      _
    $region31: #{tpu_custom_call.1} parent=1 // pred_check_branch
      %1021 = sbr.rel (0) target = $region33
    $region32: #{tpu_custom_call.1} parent=1 // pred_region
      %s1023 = ssub.s32 256, 256
      %1024 = vsyncadd [#allocation3], %s1023
      %s1026 = sshll.u32 [#allocation2], 4
      %s1027 = int_to_ptr.vmem [resolvable:$true] %s1026
      %1029 = dma.vmem_to_hbm [thread:$0]  %s1027, 256, %s7, [#allocation3]
    $region33: #{tpu_custom_call.1} parent=1 // pred_fallthru
      _
    // Predicated region
    $region34: #{tpu_custom_call.1} parent=1 // pred_check
      _
    $region35: #{tpu_custom_call.1} parent=1 // pred_check_branch
      %1031 = sbr.rel (0) target = $region37
    $region36: #{tpu_custom_call.1} parent=1 // pred_region
      %1032 = dma.done [#allocation3], 256
    $region37: #{tpu_custom_call.1} parent=1 // pred_fallthru
      _
    %1033 = vsyncpa [#allocation3], 1

</llo_original>
